<compile_context>
chip_gen: v7x
topology: tpu7x:2x2x1
jax: 0.10.0
libtpu: 0.0.40
codegen_flags: <defaults>
</compile_context>

<pallas_src>
import functools
import math

import jax
import jax.numpy as jnp
from jax.experimental import pallas as pl
from jax.experimental.pallas import tpu as pltpu


_VMEM_BLOCK_BUDGET = 24 * 1024 * 1024   # double-buffered block bytes; safe on v5e/v6e/v7x
_VMEM_LIMIT_CAP = 48 * 1024 * 1024


# --------------------------- kernels ---------------------------------------- #

def _merge_flat_kernel(lat_ref, low_ref, w1_ref, w2_ref, b_ref, o_ref):
    # lat_ref: (C1, tile_m), low_ref: (C2, tile_m) -- channels on sublanes,
    # pixels on the 128-lane axis (lane-dense, unmasked stores).
    acc = jnp.dot(w1_ref[...], lat_ref[...], preferred_element_type=jnp.float32)
    acc = acc + jnp.dot(w2_ref[...], low_ref[...],
                        preferred_element_type=jnp.float32)
    o_ref[...] = (acc + b_ref[...]).astype(o_ref.dtype)   # (Cout,1) broadcasts


def _merge_crop_kernel(lat_ref, low_ref, w1_ref, w2_ref, b_ref, o_ref, *, w_pad):
    # lat_ref: (C1, tile_h, W); low_ref: (C2, tile_h, LW); o_ref: (Cout, tile_h, W).
    # The H-crop already happened via the index_map; the W-crop is a static VMEM
    # slice here, so no cropped copy of lowres is ever materialized in HBM.
    _, tile_h, W = lat_ref.shape
    w1 = w1_ref[...]
    w2 = w2_ref[...]
    b = b_ref[...]
    lat = lat_ref[...]
    low = low_ref[:, :, w_pad:w_pad + W]          # (C2, tile_h, W)
    for t in range(tile_h):                       # static unroll; tile_h <= 32
        acc = jnp.dot(w1, lat[:, t, :], preferred_element_type=jnp.float32)
        acc = acc + jnp.dot(w2, low[:, t, :], preferred_element_type=jnp.float32)
        o_ref[:, t, :] = (acc + b).astype(o_ref.dtype)


# --------------------------- tiling helpers --------------------------------- #

def _vmem_limit(block_bytes, weight_bytes):
    limit = block_bytes + 2 * weight_bytes + 8 * 1024 * 1024
    return int(min(max(limit, 32 * 1024 * 1024), _VMEM_LIMIT_CAP))


def _choose_tile_m(m, n_batch, c1, c2, cout, act_bytes, out_bytes, max_tile=8192):
    """Pixel-tile for the flattened (C, M) kernel."""
    if m < 256:
        return m                                   # tiny: full-extent block
    per_px = 2 * ((c1 + c2) * act_bytes + cout * out_bytes)   # double-buffered
    budget = max(128, (_VMEM_BLOCK_BUDGET // per_px) // 128 * 128)
    cap_m = m if m % 128 == 0 else (m // 128) * 128            # never exceed M
    tile = max(128, min(max_tile, budget, cap_m) // 128 * 128)
    # v7x megacore shards both parallel grid axes over 2 TensorCores; prefer an
    # even total step count so neither core idles.
    if n_batch % 2 == 1:
        t = tile
        for _ in range(8):
            if (n_batch * pl.cdiv(m, t)) % 2 == 0:
                tile = t
                break
            if t <= 128:
                break
            t -= 128
    return tile


def _choose_tile_h(H, h_pad, n_batch, c1, c2, cout, W, LW, act_bytes, out_bytes):
    """Row-tile for the in-kernel-crop path, or None to fall back to a JAX crop.

    tile_h must (a) be a multiple of 8 (sublane tiling), (b) divide H (no
    ragged/OOB H block), (c) divide h_pad so the lowres H offset is expressible
    with blocked indexing, and (d) fit the VMEM block budget.
    """
    g = math.gcd(H, h_pad) if h_pad else H
    cands = [th for th in (32, 24, 16, 8) if th <= H and g % th == 0]

    def fits(th):
        blk = 2 * th * ((c1 * W + c2 * LW) * act_bytes + cout * W * out_bytes)
        return blk <= _VMEM_BLOCK_BUDGET

    cands = [th for th in cands if fits(th)]
    if not cands:
        return None
    if n_batch % 2 == 1:   # prefer an even total grid for v7x's two TensorCores
        for th in cands:
            if (n_batch * (H // th)) % 2 == 0:
                return th
    return cands[0]


# --------------------------- pallas_call wrappers ---------------------------- #

def _merge_conv1x1_flat(lat3d, low3d, w1, w2, b, out_dtype):
    """Fused concat + 1x1 conv in transposed (C, M) layout, M = H*W pixels."""
    N, C1, M = lat3d.shape
    _, C2, _ = low3d.shape
    Cout = w1.shape[0]
    act_bytes = jnp.dtype(lat3d.dtype).itemsize
    out_bytes = jnp.dtype(out_dtype).itemsize

    tile_m = _choose_tile_m(M, N, C1, C2, Cout, act_bytes, out_bytes)
    grid = (N, pl.cdiv(M, tile_m))

    block_bytes = 2 * tile_m * ((C1 + C2) * act_bytes + Cout * out_bytes)
    weight_bytes = (Cout * (C1 + C2) + Cout) * 4
    cost = pl.CostEstimate(
        flops=2 * N * M * (C1 + C2) * Cout,
        transcendentals=0,
        bytes_accessed=(N * M * (C1 + C2) * act_bytes
                        + N * M * Cout * out_bytes + weight_bytes))

    return pl.pallas_call(
        _merge_flat_kernel,
        out_shape=jax.ShapeDtypeStruct((N, Cout, M), out_dtype),
        grid_spec=pltpu.PrefetchScalarGridSpec(
            num_scalar_prefetch=0,
            grid=grid,
            in_specs=[
                pl.BlockSpec((None, C1, tile_m), lambda n, i: (n, 0, i)),
                pl.BlockSpec((None, C2, tile_m), lambda n, i: (n, 0, i)),
                pl.BlockSpec((Cout, C1), lambda n, i: (0, 0)),
                pl.BlockSpec((Cout, C2), lambda n, i: (0, 0)),
                pl.BlockSpec((Cout, 1), lambda n, i: (0, 0)),
            ],
            out_specs=pl.BlockSpec((None, Cout, tile_m), lambda n, i: (n, 0, i)),
        ),
        compiler_params=pltpu.CompilerParams(
            dimension_semantics=("parallel", "parallel"),
            vmem_limit_bytes=_vmem_limit(block_bytes, weight_bytes)),
        cost_estimate=cost,
    )(lat3d, low3d, w1, w2, b)


def _merge_conv1x1_crop(lat4d, low4d, w1, w2, b, h_pad, w_pad, tile_h, out_dtype):
    """Fused center-crop + concat + 1x1 conv; lowres never copied in HBM."""
    N, C1, H, W = lat4d.shape
    _, C2, LH, LW = low4d.shape
    Cout = w1.shape[0]
    act_bytes = jnp.dtype(lat4d.dtype).itemsize
    out_bytes = jnp.dtype(out_dtype).itemsize

    grid = (N, H // tile_h)
    h_off = h_pad // tile_h            # lowres H block offset (tile_h | h_pad)

    block_bytes = 2 * tile_h * ((C1 * W + C2 * LW) * act_bytes + Cout * W * out_bytes)
    weight_bytes = (Cout * (C1 + C2) + Cout) * 4
    cost = pl.CostEstimate(
        flops=2 * N * H * W * (C1 + C2) * Cout,
        transcendentals=0,
        bytes_accessed=(N * H * (C1 * W + C2 * LW) * act_bytes
                        + N * Cout * H * W * out_bytes + weight_bytes))

    kernel = functools.partial(_merge_crop_kernel, w_pad=w_pad)
    return pl.pallas_call(
        kernel,
        out_shape=jax.ShapeDtypeStruct((N, Cout, H, W), out_dtype),
        grid_spec=pltpu.PrefetchScalarGridSpec(
            num_scalar_prefetch=0,
            grid=grid,
            in_specs=[
                pl.BlockSpec((None, C1, tile_h, W), lambda n, i: (n, 0, i, 0)),
                pl.BlockSpec((None, C2, tile_h, LW),
                             lambda n, i: (n, 0, i + h_off, 0)),
                pl.BlockSpec((Cout, C1), lambda n, i: (0, 0)),
                pl.BlockSpec((Cout, C2), lambda n, i: (0, 0)),
                pl.BlockSpec((Cout, 1), lambda n, i: (0, 0)),
            ],
            out_specs=pl.BlockSpec((None, Cout, tile_h, W),
                                   lambda n, i: (n, 0, i, 0)),
        ),
        compiler_params=pltpu.CompilerParams(
            dimension_semantics=("parallel", "parallel"),
            vmem_limit_bytes=_vmem_limit(block_bytes, weight_bytes)),
        cost_estimate=cost,
    )(lat4d, low4d, w1, w2, b)


# --------------------------- module glue ------------------------------------ #

def _pad_img_tensor_nchw(x, size):
    """Center-pad NCHW tensor spatially to size=(H, W) (pad_img_tensor)."""
    dh = size[0] - x.shape[2]
    dw = size[1] - x.shape[3]
    return jnp.pad(x, ((0, 0), (0, 0),
                       (dh // 2, dh - dh // 2), (dw // 2, dw - dw // 2)))


class MergeLowResPallas:
    """MergeLowRes with merge_type='linear' (1x1-conv merge), Pallas-backed."""

    def __init__(self, channels, *, multiscale_retain_spatial_dims,
                 multiscale_lowres_size_factor, conv2d_bias=True, key=None,
                 out_dtype=None):
        try:
            iter(channels)
        except TypeError:
            channels = [channels] * 3
        else:
            channels = list(channels)
            if len(channels) == 1:
                channels = [channels[0]] * 3
        self.channels = list(channels)
        self.retain_spatial_dims = multiscale_retain_spatial_dims
        self.multiscale_lowres_size_factor = multiscale_lowres_size_factor
        self.out_dtype = out_dtype        # None -> latent dtype (exact Conv2d semantics)

        c_lat = self.channels[0]
        c_in = sum(self.channels[:-1])
        c_out = self.channels[-1]
        if key is None:
            key = jax.random.PRNGKey(0)
        kw, kb = jax.random.split(key)
        bound = 1.0 / (c_in ** 0.5)       # PyTorch Conv2d default uniform bound
        weight = jax.random.uniform(kw, (c_out, c_in), jnp.float32,
                                    minval=-bound, maxval=bound)
        # Pre-split the (Cout, Cin) 1x1-conv weight once (no per-call slicing).
        self.w_lat = weight[:, :c_lat]
        self.w_low = weight[:, c_lat:]
        if conv2d_bias:
            self.bias = jax.random.uniform(kb, (c_out, 1), jnp.float32,
                                           minval=-bound, maxval=bound)
        else:
            self.bias = jnp.zeros((c_out, 1), jnp.float32)

    @property
    def weight(self):          # (Cout, C1+C2), for reference checks
        return jnp.concatenate([self.w_lat, self.w_low], axis=1)

    def _flat(self, latent, lowres, out_dtype):
        N, C1, H, W = latent.shape
        _, C2, _, _ = lowres.shape
        out = _merge_conv1x1_flat(latent.reshape(N, C1, H * W),
                                  lowres.reshape(N, C2, H * W),
                                  self.w_lat, self.w_low, self.bias, out_dtype)
        return out.reshape(N, out.shape[1], H, W)

    def __call__(self, latent, lowres):
        """latent, lowres: NCHW arrays (PyTorch axis convention)."""
        N, C1, H, W = latent.shape
        _, C2, LH, LW = lowres.shape
        assert C1 == self.w_lat.shape[1] and C2 == self.w_low.shape[1]
        out_dtype = latent.dtype if self.out_dtype is None else self.out_dtype

        if self.retain_spatial_dims:
            # TODO(synk): fold the center-pad into the kernel (zero latent
            # contribution outside the window) to avoid this HBM copy.
            if (H, W) != (LH, LW):
                latent = _pad_img_tensor_nchw(latent, (LH, LW))
            return self._flat(latent, lowres, out_dtype)

        h = LH // self.multiscale_lowres_size_factor
        w = LW // self.multiscale_lowres_size_factor
        assert (h, w) == (H, W), "latent spatial dims must match cropped lowres"
        if (LH, LW) == (H, W):                     # nothing to crop
            return self._flat(latent, lowres, out_dtype)

        h_pad = (LH - h) // 2
        w_pad = (LW - w) // 2
        act_bytes = jnp.dtype(latent.dtype).itemsize
        out_bytes = jnp.dtype(out_dtype).itemsize
        tile_h = _choose_tile_h(H, h_pad, N, C1, C2, self.w_lat.shape[0],
                                W, LW, act_bytes, out_bytes)
        if tile_h is not None:
            # Center-crop folded into the kernel: no lowres copy in HBM.
            return _merge_conv1x1_crop(latent, lowres, self.w_lat, self.w_low,
                                       self.bias, h_pad, w_pad, tile_h, out_dtype)
        # Fallback (odd geometries): materialize the crop, then flat kernel.
        lowres_c = lowres[:, :, h_pad:h_pad + h, w_pad:w_pad + w]
        return self._flat(latent, lowres_c, out_dtype)


# --------------------------------- main -------------------------------------- #

if __name__ == "__main__":
    key = jax.random.PRNGKey(0)
    k_lat, k_low, k_par = jax.random.split(key, 3)

    N, C, H, W = 2, 4, 16, 16
    factor = 2
    latent = jax.random.normal(k_lat, (N, C, H, W), jnp.float32)
    lowres = jax.random.normal(k_low, (N, C, H * factor, W * factor), jnp.float32)

    # --- crop path (retain_spatial_dims=False): in-kernel center-crop -------
    mod_crop = MergeLowResPallas(
        channels=C, multiscale_retain_spatial_dims=False,
        multiscale_lowres_size_factor=factor, conv2d_bias=True, key=k_par)
    out = jax.block_until_ready(mod_crop(latent, lowres))

    lh, lw = lowres.shape[-2:]
    h, w = lh // factor, lw // factor
    hp, wp = (lh - h) // 2, (lw - w) // 2
    low_c = lowres[:, :, hp:hp + h, wp:wp + w]
    x_cat = jnp.concatenate([latent, low_c], axis=1)
    ref = (jnp.einsum("oc,nchw->nohw", mod_crop.weight, x_cat)
           + mod_crop.bias.reshape(1, -1, 1, 1))
    assert out.shape == (N, C, H, W)
    assert jnp.allclose(out, ref, atol=1e-5, rtol=1e-5)

    # --- pad path (retain_spatial_dims=True): pad + flat lane-dense kernel --
    mod_pad = MergeLowResPallas(
        channels=C, multiscale_retain_spatial_dims=True,
        multiscale_lowres_size_factor=factor, conv2d_bias=True, key=k_par)
    out2 = jax.block_until_ready(mod_pad(latent, lowres))
    lat_pad = _pad_img_tensor_nchw(latent, (lh, lw))
    x_cat2 = jnp.concatenate([lat_pad, lowres], axis=1)
    ref2 = (jnp.einsum("oc,nchw->nohw", mod_pad.weight, x_cat2)
            + mod_pad.bias.reshape(1, -1, 1, 1))
    assert out2.shape == (N, C, lh, lw)
    assert jnp.allclose(out2, ref2, atol=1e-5, rtol=1e-5)

    print("KERNEL_OK")
</pallas_src>

<mosaic_0001>
module attributes {stable_mosaic.version = 11 : i64} {
  func.func @_merge_crop_kernel(%arg0: i32, %arg1: i32, %arg2: memref<1x4x8x16xf32, #tpu.memory_space<vmem>>, %arg3: memref<1x4x8x32xf32, #tpu.memory_space<vmem>>, %arg4: memref<4x4xf32, #tpu.memory_space<vmem>>, %arg5: memref<4x4xf32, #tpu.memory_space<vmem>>, %arg6: memref<4x1xf32, #tpu.memory_space<vmem>>, %arg7: memref<1x4x8x16xf32, #tpu.memory_space<vmem>>) attributes {dimension_semantics = [#tpu.dimension_semantics<parallel>, #tpu.dimension_semantics<parallel>], iteration_bounds = array<i64: 2, 2>, scalar_prefetch = 0 : i64, scratch_operands = 0 : i64, tpu.core_type = #tpu.core_type<tc>, window_params = [{transform_indices = @transform_0, window_bounds = array<i64: 1, 4, 8, 16>}, {transform_indices = @transform_1, window_bounds = array<i64: 1, 4, 8, 32>}, {pipeline_mode = #tpu.pipeline_mode<synchronous>, transform_indices = @transform_2, window_bounds = array<i64: 4, 4>}, {pipeline_mode = #tpu.pipeline_mode<synchronous>, transform_indices = @transform_3, window_bounds = array<i64: 4, 4>}, {pipeline_mode = #tpu.pipeline_mode<synchronous>, transform_indices = @transform_4, window_bounds = array<i64: 4, 1>}, {transform_indices = @transform_5, window_bounds = array<i64: 1, 4, 8, 16>}]} {
    %c0 = arith.constant 0 : index
    %c0_0 = arith.constant 0 : index
    %0 = vector.load %arg4[%c0, %c0_0] : memref<4x4xf32, #tpu.memory_space<vmem>>, vector<4x4xf32>
    %c0_1 = arith.constant 0 : index
    %c0_2 = arith.constant 0 : index
    %1 = vector.load %arg5[%c0_1, %c0_2] : memref<4x4xf32, #tpu.memory_space<vmem>>, vector<4x4xf32>
    %c0_3 = arith.constant 0 : index
    %c0_4 = arith.constant 0 : index
    %2 = vector.load %arg6[%c0_3, %c0_4] : memref<4x1xf32, #tpu.memory_space<vmem>>, vector<4x1xf32>
    %c0_5 = arith.constant 0 : index
    %c0_6 = arith.constant 0 : index
    %c0_7 = arith.constant 0 : index
    %c0_8 = arith.constant 0 : index
    %3 = vector.load %arg2[%c0_5, %c0_6, %c0_7, %c0_8] : memref<1x4x8x16xf32, #tpu.memory_space<vmem>>, vector<1x4x8x16xf32>
    %4 = vector.shape_cast %3 : vector<1x4x8x16xf32> to vector<4x8x16xf32>
    %c0_9 = arith.constant 0 : index
    %c0_10 = arith.constant 0 : index
    %c0_11 = arith.constant 0 : index
    %c8 = arith.constant 8 : index
    %5 = vector.load %arg3[%c0_9, %c0_10, %c0_11, %c8] : memref<1x4x8x32xf32, #tpu.memory_space<vmem>>, vector<1x4x8x16xf32>
    %6 = vector.shape_cast %5 : vector<1x4x8x16xf32> to vector<4x8x16xf32>
    %7 = vector.extract_strided_slice %4 {offsets = [0, 0, 0], sizes = [4, 1, 16], strides = [1, 1, 1]} : vector<4x8x16xf32> to vector<4x1x16xf32>
    %8 = vector.shape_cast %7 : vector<4x1x16xf32> to vector<4x16xf32>
    %cst = arith.constant dense<0.000000e+00> : vector<4x16xf32>
    %9 = tpu.matmul %0, %8, %cst {dimension_numbers = #tpu.dot_dimension_numbers<[1], [0], [0], [1], [0, 0, 1, 1], [], []>} : vector<4x4xf32>, vector<4x16xf32>, vector<4x16xf32> -> vector<4x16xf32>
    %10 = vector.extract_strided_slice %6 {offsets = [0, 0, 0], sizes = [4, 1, 16], strides = [1, 1, 1]} : vector<4x8x16xf32> to vector<4x1x16xf32>
    %11 = vector.shape_cast %10 : vector<4x1x16xf32> to vector<4x16xf32>
    %cst_12 = arith.constant dense<0.000000e+00> : vector<4x16xf32>
    %12 = tpu.matmul %1, %11, %cst_12 {dimension_numbers = #tpu.dot_dimension_numbers<[1], [0], [0], [1], [0, 0, 1, 1], [], []>} : vector<4x4xf32>, vector<4x16xf32>, vector<4x16xf32> -> vector<4x16xf32>
    %13 = arith.addf %9, %12 : vector<4x16xf32>
    %14 = vector.broadcast %2 : vector<4x1xf32> to vector<4x16xf32>
    %15 = arith.addf %13, %14 : vector<4x16xf32>
    %c0_13 = arith.constant 0 : index
    %c0_14 = arith.constant 0 : index
    %c0_15 = arith.constant 0 : index
    %c0_16 = arith.constant 0 : index
    %16 = vector.load %arg7[%c0_13, %c0_14, %c0_15, %c0_16] : memref<1x4x8x16xf32, #tpu.memory_space<vmem>>, vector<1x4x1x16xf32>
    %17 = vector.shape_cast %16 : vector<1x4x1x16xf32> to vector<4x16xf32>
    %18 = vector.shape_cast %15 : vector<4x16xf32> to vector<1x4x1x16xf32>
    tpu.vector_store %arg7[%c0_13, %c0_14, %c0_15, %c0_16], %18 {strides = array<i32>} : memref<1x4x8x16xf32, #tpu.memory_space<vmem>>, vector<1x4x1x16xf32>,
    %19 = vector.extract_strided_slice %4 {offsets = [0, 1, 0], sizes = [4, 1, 16], strides = [1, 1, 1]} : vector<4x8x16xf32> to vector<4x1x16xf32>
    %20 = vector.shape_cast %19 : vector<4x1x16xf32> to vector<4x16xf32>
    %cst_17 = arith.constant dense<0.000000e+00> : vector<4x16xf32>
    %21 = tpu.matmul %0, %20, %cst_17 {dimension_numbers = #tpu.dot_dimension_numbers<[1], [0], [0], [1], [0, 0, 1, 1], [], []>} : vector<4x4xf32>, vector<4x16xf32>, vector<4x16xf32> -> vector<4x16xf32>
    %22 = vector.extract_strided_slice %6 {offsets = [0, 1, 0], sizes = [4, 1, 16], strides = [1, 1, 1]} : vector<4x8x16xf32> to vector<4x1x16xf32>
    %23 = vector.shape_cast %22 : vector<4x1x16xf32> to vector<4x16xf32>
    %cst_18 = arith.constant dense<0.000000e+00> : vector<4x16xf32>
    %24 = tpu.matmul %1, %23, %cst_18 {dimension_numbers = #tpu.dot_dimension_numbers<[1], [0], [0], [1], [0, 0, 1, 1], [], []>} : vector<4x4xf32>, vector<4x16xf32>, vector<4x16xf32> -> vector<4x16xf32>
    %25 = arith.addf %21, %24 : vector<4x16xf32>
    %26 = vector.broadcast %2 : vector<4x1xf32> to vector<4x16xf32>
    %27 = arith.addf %25, %26 : vector<4x16xf32>
    %c0_19 = arith.constant 0 : index
    %c0_20 = arith.constant 0 : index
    %c1 = arith.constant 1 : index
    %c0_21 = arith.constant 0 : index
    %28 = vector.load %arg7[%c0_19, %c0_20, %c1, %c0_21] : memref<1x4x8x16xf32, #tpu.memory_space<vmem>>, vector<1x4x1x16xf32>
    %29 = vector.shape_cast %28 : vector<1x4x1x16xf32> to vector<4x16xf32>
    %30 = vector.shape_cast %27 : vector<4x16xf32> to vector<1x4x1x16xf32>
    tpu.vector_store %arg7[%c0_19, %c0_20, %c1, %c0_21], %30 {strides = array<i32>} : memref<1x4x8x16xf32, #tpu.memory_space<vmem>>, vector<1x4x1x16xf32>,
    %31 = vector.extract_strided_slice %4 {offsets = [0, 2, 0], sizes = [4, 1, 16], strides = [1, 1, 1]} : vector<4x8x16xf32> to vector<4x1x16xf32>
    %32 = vector.shape_cast %31 : vector<4x1x16xf32> to vector<4x16xf32>
    %cst_22 = arith.constant dense<0.000000e+00> : vector<4x16xf32>
    %33 = tpu.matmul %0, %32, %cst_22 {dimension_numbers = #tpu.dot_dimension_numbers<[1], [0], [0], [1], [0, 0, 1, 1], [], []>} : vector<4x4xf32>, vector<4x16xf32>, vector<4x16xf32> -> vector<4x16xf32>
    %34 = vector.extract_strided_slice %6 {offsets = [0, 2, 0], sizes = [4, 1, 16], strides = [1, 1, 1]} : vector<4x8x16xf32> to vector<4x1x16xf32>
    %35 = vector.shape_cast %34 : vector<4x1x16xf32> to vector<4x16xf32>
    %cst_23 = arith.constant dense<0.000000e+00> : vector<4x16xf32>
    %36 = tpu.matmul %1, %35, %cst_23 {dimension_numbers = #tpu.dot_dimension_numbers<[1], [0], [0], [1], [0, 0, 1, 1], [], []>} : vector<4x4xf32>, vector<4x16xf32>, vector<4x16xf32> -> vector<4x16xf32>
    %37 = arith.addf %33, %36 : vector<4x16xf32>
    %38 = vector.broadcast %2 : vector<4x1xf32> to vector<4x16xf32>
    %39 = arith.addf %37, %38 : vector<4x16xf32>
    %c0_24 = arith.constant 0 : index
    %c0_25 = arith.constant 0 : index
    %c2 = arith.constant 2 : index
    %c0_26 = arith.constant 0 : index
    %40 = vector.load %arg7[%c0_24, %c0_25, %c2, %c0_26] : memref<1x4x8x16xf32, #tpu.memory_space<vmem>>, vector<1x4x1x16xf32>
    %41 = vector.shape_cast %40 : vector<1x4x1x16xf32> to vector<4x16xf32>
    %42 = vector.shape_cast %39 : vector<4x16xf32> to vector<1x4x1x16xf32>
    tpu.vector_store %arg7[%c0_24, %c0_25, %c2, %c0_26], %42 {strides = array<i32>} : memref<1x4x8x16xf32, #tpu.memory_space<vmem>>, vector<1x4x1x16xf32>,
    %43 = vector.extract_strided_slice %4 {offsets = [0, 3, 0], sizes = [4, 1, 16], strides = [1, 1, 1]} : vector<4x8x16xf32> to vector<4x1x16xf32>
    %44 = vector.shape_cast %43 : vector<4x1x16xf32> to vector<4x16xf32>
    %cst_27 = arith.constant dense<0.000000e+00> : vector<4x16xf32>
    %45 = tpu.matmul %0, %44, %cst_27 {dimension_numbers = #tpu.dot_dimension_numbers<[1], [0], [0], [1], [0, 0, 1, 1], [], []>} : vector<4x4xf32>, vector<4x16xf32>, vector<4x16xf32> -> vector<4x16xf32>
    %46 = vector.extract_strided_slice %6 {offsets = [0, 3, 0], sizes = [4, 1, 16], strides = [1, 1, 1]} : vector<4x8x16xf32> to vector<4x1x16xf32>
    %47 = vector.shape_cast %46 : vector<4x1x16xf32> to vector<4x16xf32>
    %cst_28 = arith.constant dense<0.000000e+00> : vector<4x16xf32>
    %48 = tpu.matmul %1, %47, %cst_28 {dimension_numbers = #tpu.dot_dimension_numbers<[1], [0], [0], [1], [0, 0, 1, 1], [], []>} : vector<4x4xf32>, vector<4x16xf32>, vector<4x16xf32> -> vector<4x16xf32>
    %49 = arith.addf %45, %48 : vector<4x16xf32>
    %50 = vector.broadcast %2 : vector<4x1xf32> to vector<4x16xf32>
    %51 = arith.addf %49, %50 : vector<4x16xf32>
    %c0_29 = arith.constant 0 : index
    %c0_30 = arith.constant 0 : index
    %c3 = arith.constant 3 : index
    %c0_31 = arith.constant 0 : index
    %52 = vector.load %arg7[%c0_29, %c0_30, %c3, %c0_31] : memref<1x4x8x16xf32, #tpu.memory_space<vmem>>, vector<1x4x1x16xf32>
    %53 = vector.shape_cast %52 : vector<1x4x1x16xf32> to vector<4x16xf32>
    %54 = vector.shape_cast %51 : vector<4x16xf32> to vector<1x4x1x16xf32>
    tpu.vector_store %arg7[%c0_29, %c0_30, %c3, %c0_31], %54 {strides = array<i32>} : memref<1x4x8x16xf32, #tpu.memory_space<vmem>>, vector<1x4x1x16xf32>,
    %55 = vector.extract_strided_slice %4 {offsets = [0, 4, 0], sizes = [4, 1, 16], strides = [1, 1, 1]} : vector<4x8x16xf32> to vector<4x1x16xf32>
    %56 = vector.shape_cast %55 : vector<4x1x16xf32> to vector<4x16xf32>
    %cst_32 = arith.constant dense<0.000000e+00> : vector<4x16xf32>
    %57 = tpu.matmul %0, %56, %cst_32 {dimension_numbers = #tpu.dot_dimension_numbers<[1], [0], [0], [1], [0, 0, 1, 1], [], []>} : vector<4x4xf32>, vector<4x16xf32>, vector<4x16xf32> -> vector<4x16xf32>
    %58 = vector.extract_strided_slice %6 {offsets = [0, 4, 0], sizes = [4, 1, 16], strides = [1, 1, 1]} : vector<4x8x16xf32> to vector<4x1x16xf32>
    %59 = vector.shape_cast %58 : vector<4x1x16xf32> to vector<4x16xf32>
    %cst_33 = arith.constant dense<0.000000e+00> : vector<4x16xf32>
    %60 = tpu.matmul %1, %59, %cst_33 {dimension_numbers = #tpu.dot_dimension_numbers<[1], [0], [0], [1], [0, 0, 1, 1], [], []>} : vector<4x4xf32>, vector<4x16xf32>, vector<4x16xf32> -> vector<4x16xf32>
    %61 = arith.addf %57, %60 : vector<4x16xf32>
    %62 = vector.broadcast %2 : vector<4x1xf32> to vector<4x16xf32>
    %63 = arith.addf %61, %62 : vector<4x16xf32>
    %c0_34 = arith.constant 0 : index
    %c0_35 = arith.constant 0 : index
    %c4 = arith.constant 4 : index
    %c0_36 = arith.constant 0 : index
    %64 = vector.load %arg7[%c0_34, %c0_35, %c4, %c0_36] : memref<1x4x8x16xf32, #tpu.memory_space<vmem>>, vector<1x4x1x16xf32>
    %65 = vector.shape_cast %64 : vector<1x4x1x16xf32> to vector<4x16xf32>
    %66 = vector.shape_cast %63 : vector<4x16xf32> to vector<1x4x1x16xf32>
    tpu.vector_store %arg7[%c0_34, %c0_35, %c4, %c0_36], %66 {strides = array<i32>} : memref<1x4x8x16xf32, #tpu.memory_space<vmem>>, vector<1x4x1x16xf32>,
    %67 = vector.extract_strided_slice %4 {offsets = [0, 5, 0], sizes = [4, 1, 16], strides = [1, 1, 1]} : vector<4x8x16xf32> to vector<4x1x16xf32>
    %68 = vector.shape_cast %67 : vector<4x1x16xf32> to vector<4x16xf32>
    %cst_37 = arith.constant dense<0.000000e+00> : vector<4x16xf32>
    %69 = tpu.matmul %0, %68, %cst_37 {dimension_numbers = #tpu.dot_dimension_numbers<[1], [0], [0], [1], [0, 0, 1, 1], [], []>} : vector<4x4xf32>, vector<4x16xf32>, vector<4x16xf32> -> vector<4x16xf32>
    %70 = vector.extract_strided_slice %6 {offsets = [0, 5, 0], sizes = [4, 1, 16], strides = [1, 1, 1]} : vector<4x8x16xf32> to vector<4x1x16xf32>
    %71 = vector.shape_cast %70 : vector<4x1x16xf32> to vector<4x16xf32>
    %cst_38 = arith.constant dense<0.000000e+00> : vector<4x16xf32>
    %72 = tpu.matmul %1, %71, %cst_38 {dimension_numbers = #tpu.dot_dimension_numbers<[1], [0], [0], [1], [0, 0, 1, 1], [], []>} : vector<4x4xf32>, vector<4x16xf32>, vector<4x16xf32> -> vector<4x16xf32>
    %73 = arith.addf %69, %72 : vector<4x16xf32>
    %74 = vector.broadcast %2 : vector<4x1xf32> to vector<4x16xf32>
    %75 = arith.addf %73, %74 : vector<4x16xf32>
    %c0_39 = arith.constant 0 : index
    %c0_40 = arith.constant 0 : index
    %c5 = arith.constant 5 : index
    %c0_41 = arith.constant 0 : index
    %76 = vector.load %arg7[%c0_39, %c0_40, %c5, %c0_41] : memref<1x4x8x16xf32, #tpu.memory_space<vmem>>, vector<1x4x1x16xf32>
    %77 = vector.shape_cast %76 : vector<1x4x1x16xf32> to vector<4x16xf32>
    %78 = vector.shape_cast %75 : vector<4x16xf32> to vector<1x4x1x16xf32>
    tpu.vector_store %arg7[%c0_39, %c0_40, %c5, %c0_41], %78 {strides = array<i32>} : memref<1x4x8x16xf32, #tpu.memory_space<vmem>>, vector<1x4x1x16xf32>,
    %79 = vector.extract_strided_slice %4 {offsets = [0, 6, 0], sizes = [4, 1, 16], strides = [1, 1, 1]} : vector<4x8x16xf32> to vector<4x1x16xf32>
    %80 = vector.shape_cast %79 : vector<4x1x16xf32> to vector<4x16xf32>
    %cst_42 = arith.constant dense<0.000000e+00> : vector<4x16xf32>
    %81 = tpu.matmul %0, %80, %cst_42 {dimension_numbers = #tpu.dot_dimension_numbers<[1], [0], [0], [1], [0, 0, 1, 1], [], []>} : vector<4x4xf32>, vector<4x16xf32>, vector<4x16xf32> -> vector<4x16xf32>
    %82 = vector.extract_strided_slice %6 {offsets = [0, 6, 0], sizes = [4, 1, 16], strides = [1, 1, 1]} : vector<4x8x16xf32> to vector<4x1x16xf32>
    %83 = vector.shape_cast %82 : vector<4x1x16xf32> to vector<4x16xf32>
    %cst_43 = arith.constant dense<0.000000e+00> : vector<4x16xf32>
    %84 = tpu.matmul %1, %83, %cst_43 {dimension_numbers = #tpu.dot_dimension_numbers<[1], [0], [0], [1], [0, 0, 1, 1], [], []>} : vector<4x4xf32>, vector<4x16xf32>, vector<4x16xf32> -> vector<4x16xf32>
    %85 = arith.addf %81, %84 : vector<4x16xf32>
    %86 = vector.broadcast %2 : vector<4x1xf32> to vector<4x16xf32>
    %87 = arith.addf %85, %86 : vector<4x16xf32>
    %c0_44 = arith.constant 0 : index
    %c0_45 = arith.constant 0 : index
    %c6 = arith.constant 6 : index
    %c0_46 = arith.constant 0 : index
    %88 = vector.load %arg7[%c0_44, %c0_45, %c6, %c0_46] : memref<1x4x8x16xf32, #tpu.memory_space<vmem>>, vector<1x4x1x16xf32>
    %89 = vector.shape_cast %88 : vector<1x4x1x16xf32> to vector<4x16xf32>
    %90 = vector.shape_cast %87 : vector<4x16xf32> to vector<1x4x1x16xf32>
    tpu.vector_store %arg7[%c0_44, %c0_45, %c6, %c0_46], %90 {strides = array<i32>} : memref<1x4x8x16xf32, #tpu.memory_space<vmem>>, vector<1x4x1x16xf32>,
    %91 = vector.extract_strided_slice %4 {offsets = [0, 7, 0], sizes = [4, 1, 16], strides = [1, 1, 1]} : vector<4x8x16xf32> to vector<4x1x16xf32>
    %92 = vector.shape_cast %91 : vector<4x1x16xf32> to vector<4x16xf32>
    %cst_47 = arith.constant dense<0.000000e+00> : vector<4x16xf32>
    %93 = tpu.matmul %0, %92, %cst_47 {dimension_numbers = #tpu.dot_dimension_numbers<[1], [0], [0], [1], [0, 0, 1, 1], [], []>} : vector<4x4xf32>, vector<4x16xf32>, vector<4x16xf32> -> vector<4x16xf32>
    %94 = vector.extract_strided_slice %6 {offsets = [0, 7, 0], sizes = [4, 1, 16], strides = [1, 1, 1]} : vector<4x8x16xf32> to vector<4x1x16xf32>
    %95 = vector.shape_cast %94 : vector<4x1x16xf32> to vector<4x16xf32>
    %cst_48 = arith.constant dense<0.000000e+00> : vector<4x16xf32>
    %96 = tpu.matmul %1, %95, %cst_48 {dimension_numbers = #tpu.dot_dimension_numbers<[1], [0], [0], [1], [0, 0, 1, 1], [], []>} : vector<4x4xf32>, vector<4x16xf32>, vector<4x16xf32> -> vector<4x16xf32>
    %97 = arith.addf %93, %96 : vector<4x16xf32>
    %98 = vector.broadcast %2 : vector<4x1xf32> to vector<4x16xf32>
    %99 = arith.addf %97, %98 : vector<4x16xf32>
    %c0_49 = arith.constant 0 : index
    %c0_50 = arith.constant 0 : index
    %c7 = arith.constant 7 : index
    %c0_51 = arith.constant 0 : index
    %100 = vector.load %arg7[%c0_49, %c0_50, %c7, %c0_51] : memref<1x4x8x16xf32, #tpu.memory_space<vmem>>, vector<1x4x1x16xf32>
    %101 = vector.shape_cast %100 : vector<1x4x1x16xf32> to vector<4x16xf32>
    %102 = vector.shape_cast %99 : vector<4x16xf32> to vector<1x4x1x16xf32>
    tpu.vector_store %arg7[%c0_49, %c0_50, %c7, %c0_51], %102 {strides = array<i32>} : memref<1x4x8x16xf32, #tpu.memory_space<vmem>>, vector<1x4x1x16xf32>,
    return
  }
  func.func @transform_0(%arg0: i32, %arg1: i32) -> (i32, i32, i32, i32) {
    %c0_i32 = arith.constant 0 : i32
    %c0_i32_0 = arith.constant 0 : i32
    %c0_i32_1 = arith.constant 0 : i32
    return %arg0, %c0_i32, %arg1, %c0_i32_0 : i32, i32, i32, i32
  }
  func.func @transform_1(%arg0: i32, %arg1: i32) -> (i32, i32, i32, i32) {
    %c1_i32 = arith.constant 1 : i32
    %0 = arith.addi %arg1, %c1_i32 : i32
    %c0_i32 = arith.constant 0 : i32
    %c0_i32_0 = arith.constant 0 : i32
    %c0_i32_1 = arith.constant 0 : i32
    return %arg0, %c0_i32, %0, %c0_i32_0 : i32, i32, i32, i32
  }
  func.func @transform_2(%arg0: i32, %arg1: i32) -> (i32, i32) {
    %c0_i32 = arith.constant 0 : i32
    %c0_i32_0 = arith.constant 0 : i32
    %c0_i32_1 = arith.constant 0 : i32
    return %c0_i32, %c0_i32_0 : i32, i32
  }
  func.func @transform_3(%arg0: i32, %arg1: i32) -> (i32, i32) {
    %c0_i32 = arith.constant 0 : i32
    %c0_i32_0 = arith.constant 0 : i32
    %c0_i32_1 = arith.constant 0 : i32
    return %c0_i32, %c0_i32_0 : i32, i32
  }
  func.func @transform_4(%arg0: i32, %arg1: i32) -> (i32, i32) {
    %c0_i32 = arith.constant 0 : i32
    %c0_i32_0 = arith.constant 0 : i32
    %c0_i32_1 = arith.constant 0 : i32
    return %c0_i32, %c0_i32_0 : i32, i32
  }
  func.func @transform_5(%arg0: i32, %arg1: i32) -> (i32, i32, i32, i32) {
    %c0_i32 = arith.constant 0 : i32
    %c0_i32_0 = arith.constant 0 : i32
    %c0_i32_1 = arith.constant 0 : i32
    return %arg0, %c0_i32, %arg1, %c0_i32_0 : i32, i32, i32, i32
  }
}

</mosaic_0001>

<llo_original>
// kernel: tpu_custom_call.1
$region0: #{tpu_custom_call.1}
  #allocation0 [shape = 'u32[]', space=smem, size = 0x4, offset = 0x4, fixed_abs, tag = 'smem constant byte address 0x4 - core index']
  #allocation1 [shape = 'u32[144,128]{1,0:T(1,128)}', space=vmem, size = 0x12000, scoped, tag = 'internal scratch']
  %s0 = inlined_call_operand.hbm [shape: f32[2,4,16,16], index: 0, kind: input, shape index: {}]
  %s1 = inlined_call_operand.hbm [shape: f32[2,4,32,32], index: 1, kind: input, shape index: {}]
  %s2 = inlined_call_operand.vmem [shape: f32[4,4], index: 2, kind: input, shape index: {}]
  %s3 = inlined_call_operand.vmem [shape: f32[4,4], index: 3, kind: input, shape index: {}]
  %s4 = inlined_call_operand.vmem [shape: f32[4,1], index: 4, kind: input, shape index: {}]
  %s5 = inlined_call_operand.hbm [shape: f32[2,4,16,16], index: 5, kind: output, shape index: {}]
  %s6 = sld [smem:[#allocation0]]
  $region61: #{tpu_custom_call.1} parent=0
    _
  %s8 = ssub.s32 1, %s6
  %s9 = scalar_select 0, %s8, %s6
  $region1: #{tpu_custom_call.1} parent=0
    #allocation2 [shape = 'u8[32768]{0}', space=vmem, size = 0x8000, scoped, tag = 'input window, operand 0']
    #allocation3 [shape = 's32[2]{0}', space=sflag, size = 0x8, scoped, tag = 'scoped memory for tpu_custom_call.1']
    #allocation4 [shape = 's32[2]{0}', space=sflag, size = 0x8, scoped, tag = 'scoped memory for tpu_custom_call.1']
    #allocation5 [shape = 'u8[32768]{0}', space=vmem, size = 0x8000, scoped, tag = 'input window, operand 1']
    #allocation6 [shape = 's32[2]{0}', space=sflag, size = 0x8, scoped, tag = 'scoped memory for tpu_custom_call.1']
    #allocation7 [shape = 'u8[32768]{0}', space=vmem, size = 0x8000, scoped, tag = 'output window, operand 0']
    %10 = vsyncpa [#allocation3], 0
    %s11 = scalar_lea.sflag [#allocation3], 1
    %12 = vsyncpa %s11, 0
    %13 = vsyncpa [#allocation6], 0
    %s14 = scalar_lea.sflag [#allocation6], 1
    %15 = vsyncpa %s14, 0
    %16 = vsyncpa [#allocation4], 0
    %s17 = scalar_lea.sflag [#allocation4], 1
    %18 = vsyncpa %s17, 0
    loop: start=0, step=1, limit=6
    $region2: #{tpu_custom_call.1} parent=1 // loop_pre_header
      _
    $region3: #{tpu_custom_call.1} parent=1 // loop_header
      %s20 = sphi 0, %s24
      %p21 = scmp.ge.s32.totalorder %s20, 6
      %s27 = sphi 0, %s39
      %s28 = sphi 0, %s35
      %s29 = sphi 0, %s27
      %s30 = sphi 0, %s28
      %s31 = sphi 0, %s29
      %s32 = sphi 0, %s30
      %s44 = sphi 0, %s46
      %s47 = sphi 0, %s44
      %s48 = sphi 0, %s47
      %s64 = sphi 0, %s48
      %s74 = sphi 0, %s76
      %s77 = sphi 0, %s74
      %s78 = sphi 0, %s77
      %s94 = sphi 0, %s78
      %s98 = sphi 0, %s98
      %s100 = sphi 0, %s98
      %s101 = sphi 0, %s100
      %s115 = sphi 0, %s101
      %s119 = sphi 0, %s119
      %s121 = sphi 0, %s119
      %s122 = sphi 0, %s121
      %s136 = sphi 0, %s122
      %s140 = sphi 0, %s140
      %s142 = sphi 0, %s140
      %s143 = sphi 0, %s142
      %s157 = sphi 0, %s143
      %s165 = sphi 0, %s167
      %s168 = sphi 0, %s165
      %s169 = sphi 0, %s168
      %s185 = sphi 0, %s169
    $region4: #{tpu_custom_call.1} parent=1 // loop_header_branch
      %23 = sbr.rel (%p21) target = $region8
    $region5: #{tpu_custom_call.1} parent=1 // loop_body
      %s25 = ssub.s32 %s20, 1
      %s26 = ssub.s32 %s20, 2
      %s33 = sadd.s32 1, %s28
      %p34 = scmp.ge.s32.totalorder %s33, 2
      %s35 = scalar_select %p34, 0, %s33
      %s36 = sadd.s32 1, %s27
      %s37 = scalar_select %p34, %s36, %s27
      %p38 = scmp.ge.s32.totalorder %s37, 2
      %s39 = scalar_select %p38, 0, %s37
      %s40 = ssub.s32 %s27, %s39
      %s41 = ssub.s32 %s28, %s35
      %s42 = sor.u32 %s40, %s41
      %p43 = scmp.eq.s32.totalorder %s42, 0
      %s45 = sadd.s32 %s44, 1
      %s46 = scalar_select %p43, %s44, %s45
      %p49 = pneg %p43
      %p50 = scmp.eq.s32.totalorder %s20, 3
      %p51 = por %p49, %p50
      %p52 = scmp.ne.s32.totalorder %s44, %s47
      %p53 = scmp.eq.s32.totalorder %s20, 0
      %p54 = por %p52, %p53
      %p55 = scmp.ne.s32.totalorder %s44, %s47
      %p56 = scmp.eq.s32.totalorder %s25, 3
      %p57 = por %p55, %p56
      %p58 = scmp.ne.s32.totalorder %s47, %s48
      %p59 = scmp.eq.s32.totalorder %s25, 0
      %p60 = por %p58, %p59
      %p61 = scmp.ne.s32.totalorder %s47, %s48
      %p62 = scmp.eq.s32.totalorder %s26, 3
      %p63 = por %p61, %p62
      %p65 = scmp.ne.s32.totalorder %s48, %s64
      %p66 = scmp.eq.s32.totalorder %s26, 0
      %p67 = por %p65, %p66
      %s68 = sadd.s32 %s28, 1
      %s69 = sadd.s32 %s35, 1
      %s70 = ssub.s32 %s27, %s39
      %s71 = ssub.s32 %s68, %s69
      %s72 = sor.u32 %s70, %s71
      %p73 = scmp.eq.s32.totalorder %s72, 0
      %s75 = sadd.s32 %s74, 1
      %s76 = scalar_select %p73, %s74, %s75
      %p79 = pneg %p73
      %p80 = scmp.eq.s32.totalorder %s20, 3
      %p81 = por %p79, %p80
      %p82 = scmp.ne.s32.totalorder %s74, %s77
      %p83 = scmp.eq.s32.totalorder %s20, 0
      %p84 = por %p82, %p83
      %p85 = scmp.ne.s32.totalorder %s74, %s77
      %p86 = scmp.eq.s32.totalorder %s25, 3
      %p87 = por %p85, %p86
      %p88 = scmp.ne.s32.totalorder %s77, %s78
      %p89 = scmp.eq.s32.totalorder %s25, 0
      %p90 = por %p88, %p89
      %p91 = scmp.ne.s32.totalorder %s77, %s78
      %p92 = scmp.eq.s32.totalorder %s26, 3
      %p93 = por %p91, %p92
      %p95 = scmp.ne.s32.totalorder %s78, %s94
      %p96 = scmp.eq.s32.totalorder %s26, 0
      %p97 = por %p95, %p96
      %s99 = sadd.s32 %s98, 1
      %p102 = scmp.eq.s32.totalorder %s20, 3
      %p103 = scmp.ne.s32.totalorder %s98, %s100
      %p104 = scmp.eq.s32.totalorder %s20, 0
      %p105 = por %p103, %p104
      %p106 = scmp.ne.s32.totalorder %s98, %s100
      %p107 = scmp.eq.s32.totalorder %s25, 3
      %p108 = por %p106, %p107
      %p109 = scmp.ne.s32.totalorder %s100, %s101
      %p110 = scmp.eq.s32.totalorder %s25, 0
      %p111 = por %p109, %p110
      %p112 = scmp.ne.s32.totalorder %s100, %s101
      %p113 = scmp.eq.s32.totalorder %s26, 3
      %p114 = por %p112, %p113
      %p116 = scmp.ne.s32.totalorder %s101, %s115
      %p117 = scmp.eq.s32.totalorder %s26, 0
      %p118 = por %p116, %p117
      %s120 = sadd.s32 %s119, 1
      %p123 = scmp.eq.s32.totalorder %s20, 3
      %p124 = scmp.ne.s32.totalorder %s119, %s121
      %p125 = scmp.eq.s32.totalorder %s20, 0
      %p126 = por %p124, %p125
      %p127 = scmp.ne.s32.totalorder %s119, %s121
      %p128 = scmp.eq.s32.totalorder %s25, 3
      %p129 = por %p127, %p128
      %p130 = scmp.ne.s32.totalorder %s121, %s122
      %p131 = scmp.eq.s32.totalorder %s25, 0
      %p132 = por %p130, %p131
      %p133 = scmp.ne.s32.totalorder %s121, %s122
      %p134 = scmp.eq.s32.totalorder %s26, 3
      %p135 = por %p133, %p134
      %p137 = scmp.ne.s32.totalorder %s122, %s136
      %p138 = scmp.eq.s32.totalorder %s26, 0
      %p139 = por %p137, %p138
      %s141 = sadd.s32 %s140, 1
      %p144 = scmp.eq.s32.totalorder %s20, 3
      %p145 = scmp.ne.s32.totalorder %s140, %s142
      %p146 = scmp.eq.s32.totalorder %s20, 0
      %p147 = por %p145, %p146
      %p148 = scmp.ne.s32.totalorder %s140, %s142
      %p149 = scmp.eq.s32.totalorder %s25, 3
      %p150 = por %p148, %p149
      %p151 = scmp.ne.s32.totalorder %s142, %s143
      %p152 = scmp.eq.s32.totalorder %s25, 0
      %p153 = por %p151, %p152
      %p154 = scmp.ne.s32.totalorder %s142, %s143
      %p155 = scmp.eq.s32.totalorder %s26, 3
      %p156 = por %p154, %p155
      %p158 = scmp.ne.s32.totalorder %s143, %s157
      %p159 = scmp.eq.s32.totalorder %s26, 0
      %p160 = por %p158, %p159
      %s161 = ssub.s32 %s27, %s39
      %s162 = ssub.s32 %s28, %s35
      %s163 = sor.u32 %s161, %s162
      %p164 = scmp.eq.s32.totalorder %s163, 0
      %s166 = sadd.s32 %s165, 1
      %s167 = scalar_select %p164, %s165, %s166
      %p170 = pneg %p164
      %p171 = scmp.eq.s32.totalorder %s20, 3
      %p172 = por %p170, %p171
      %p173 = scmp.ne.s32.totalorder %s165, %s168
      %p174 = scmp.eq.s32.totalorder %s20, 0
      %p175 = por %p173, %p174
      %p176 = scmp.ne.s32.totalorder %s165, %s168
      %p177 = scmp.eq.s32.totalorder %s25, 3
      %p178 = por %p176, %p177
      %p179 = scmp.ne.s32.totalorder %s168, %s169
      %p180 = scmp.eq.s32.totalorder %s25, 0
      %p181 = por %p179, %p180
      %p182 = scmp.ne.s32.totalorder %s168, %s169
      %p183 = scmp.eq.s32.totalorder %s26, 3
      %p184 = por %p182, %p183
      %p186 = scmp.ne.s32.totalorder %s169, %s185
      %p187 = scmp.eq.s32.totalorder %s26, 0
      %p188 = por %p186, %p187
      %p189 = scmp.le.s32.totalorder 1, %s20
      %p190 = scmp.lt.s32.totalorder %s20, 5
      %p191 = pnand %p189, %p190
      %p192 = pneg %p191
      // Predicated region
      $region9: #{tpu_custom_call.1} parent=5 // pred_check
        _
      $region10: #{tpu_custom_call.1} parent=5 // pred_check_branch
        %194 = sbr.rel (%p191) target = $region12
      $region11: #{tpu_custom_call.1} parent=5 // pred_region
        %s195 = ssub.s32 %s20, 1
        // Predicated region
        $region13: #{tpu_custom_call.1} parent=11 // pred_check
          %p196 = pneg %p111
        $region14: #{tpu_custom_call.1} parent=11 // pred_check_branch
          %198 = sbr.rel (%p196) target = $region16
        $region15: #{tpu_custom_call.1} parent=11 // pred_region
          _
        $region16: #{tpu_custom_call.1} parent=11 // pred_fallthru
          _
        // Predicated region
        $region17: #{tpu_custom_call.1} parent=11 // pred_check
          %p199 = pneg %p132
        $region18: #{tpu_custom_call.1} parent=11 // pred_check_branch
          %201 = sbr.rel (%p199) target = $region20
        $region19: #{tpu_custom_call.1} parent=11 // pred_region
          _
        $region20: #{tpu_custom_call.1} parent=11 // pred_fallthru
          _
        // Predicated region
        $region21: #{tpu_custom_call.1} parent=11 // pred_check
          %p202 = pneg %p153
        $region22: #{tpu_custom_call.1} parent=11 // pred_check_branch
          %204 = sbr.rel (%p202) target = $region24
        $region23: #{tpu_custom_call.1} parent=11 // pred_region
          _
        $region24: #{tpu_custom_call.1} parent=11 // pred_fallthru
          _
      $region12: #{tpu_custom_call.1} parent=5 // pred_fallthru
        _
      %p205 = scmp.lt.s32.totalorder %s20, 4
      // Predicated region
      $region25: #{tpu_custom_call.1} parent=5 // pred_check
        %p206 = pneg %p205
      $region26: #{tpu_custom_call.1} parent=5 // pred_check_branch
        %208 = sbr.rel (%p206) target = $region28
      $region27: #{tpu_custom_call.1} parent=5 // pred_region
        // Predicated region
        $region29: #{tpu_custom_call.1} parent=27 // pred_check
          %p209 = pneg %p54
        $region30: #{tpu_custom_call.1} parent=27 // pred_check_branch
          %211 = sbr.rel (%p209) target = $region32
        $region31: #{tpu_custom_call.1} parent=27 // pred_region
          %s212 = sand.u32 %s44, 1
          %s213 = scalar_lea.sflag [#allocation3], %s212
          %s214 = sand.u32 %s44, 1
          %s215 = smul.addr %s214, 32
          %s216 = scalar_lea.vmem [#allocation2], %s215
          %s218 = ssub.s32 512, 512
          %219 = vsyncadd %s213, %s218
          %s220 = smul.addr %s27, 8
          %s221 = sadd.s32 %s28, %s220
          %s222 = smul.addr %s221, 128
          %s223 = scalar_lea.hbm %s0, %s222
          %s224 = sshll.u32 %s216, 4
          %s225 = int_to_ptr.vmem [resolvable:$true] %s224
          %230 = dma.hbm_to_vmem [thread:$0]  %s223, 512, %s225, %s213, 256, 128, 8
        $region32: #{tpu_custom_call.1} parent=27 // pred_fallthru
          _
        // Predicated region
        $region33: #{tpu_custom_call.1} parent=27 // pred_check
          %p231 = pneg %p84
        $region34: #{tpu_custom_call.1} parent=27 // pred_check_branch
          %233 = sbr.rel (%p231) target = $region36
        $region35: #{tpu_custom_call.1} parent=27 // pred_region
          %s234 = sand.u32 %s74, 1
          %s235 = scalar_lea.sflag [#allocation6], %s234
          %s236 = sand.u32 %s74, 1
          %s237 = smul.addr %s236, 32
          %s238 = scalar_lea.vmem [#allocation5], %s237
          %s239 = sadd.s32 %s28, 1
          %s241 = ssub.s32 512, 512
          %242 = vsyncadd %s235, %s241
          %s243 = smul.addr %s27, 16
          %s244 = sadd.s32 %s239, %s243
          %s245 = smul.addr %s244, 128
          %s246 = scalar_lea.hbm %s1, %s245
          %s247 = sshll.u32 %s238, 4
          %s248 = int_to_ptr.vmem [resolvable:$true] %s247
          %253 = dma.hbm_to_vmem [thread:$0]  %s246, 512, %s248, %s235, 512, 128, 8
        $region36: #{tpu_custom_call.1} parent=27 // pred_fallthru
          _
      $region28: #{tpu_custom_call.1} parent=5 // pred_fallthru
        _
      %p254 = scmp.le.s32.totalorder 1, %s20
      %p255 = scmp.lt.s32.totalorder %s20, 5
      %p256 = pnand %p254, %p255
      %p257 = pneg %p256
      // Predicated region
      $region37: #{tpu_custom_call.1} parent=5 // pred_check
        _
      $region38: #{tpu_custom_call.1} parent=5 // pred_check_branch
        %259 = sbr.rel (%p256) target = $region40
      $region39: #{tpu_custom_call.1} parent=5 // pred_region
        %s260 = ssub.s32 %s20, 1
        %s261 = sand.u32 %s47, 1
        %s262 = scalar_lea.sflag [#allocation3], %s261
        %s263 = sand.u32 %s47, 1
        %s264 = smul.addr %s263, 32
        %s265 = scalar_lea.vmem [#allocation2], %s264
        // Predicated region
        $region41: #{tpu_custom_call.1} parent=39 // pred_check
          %p266 = pneg %p60
        $region42: #{tpu_custom_call.1} parent=39 // pred_check_branch
          %268 = sbr.rel (%p266) target = $region44
        $region43: #{tpu_custom_call.1} parent=39 // pred_region
          %269 = dma.done %s262, 512
        $region44: #{tpu_custom_call.1} parent=39 // pred_fallthru
          _
        %s270 = sand.u32 %s77, 1
        %s271 = scalar_lea.sflag [#allocation6], %s270
        %s272 = sand.u32 %s77, 1
        %s273 = smul.addr %s272, 32
        %s274 = scalar_lea.vmem [#allocation5], %s273
        // Predicated region
        $region45: #{tpu_custom_call.1} parent=39 // pred_check
          %p275 = pneg %p90
        $region46: #{tpu_custom_call.1} parent=39 // pred_check_branch
          %277 = sbr.rel (%p275) target = $region48
        $region47: #{tpu_custom_call.1} parent=39 // pred_region
          %278 = dma.done %s271, 512
        $region48: #{tpu_custom_call.1} parent=39 // pred_fallthru
          _
        %s279 = sand.u32 %s47, 1
        %s280 = scalar_lea.sflag [#allocation3], %s279
        %s281 = sand.u32 %s47, 1
        %s282 = smul.addr %s281, 32
        %s283 = scalar_lea.vmem [#allocation2], %s282
        %p284 = pneg %p60
        %p285 = pneg %p57
        %s286 = sand.u32 %s77, 1
        %s287 = scalar_lea.sflag [#allocation6], %s286
        %s288 = sand.u32 %s77, 1
        %s289 = smul.addr %s288, 32
        %s290 = scalar_lea.vmem [#allocation5], %s289
        %p291 = pneg %p90
        %p292 = pneg %p87
        %p293 = pneg %p111
        %p294 = pneg %p108
        %p295 = pneg %p132
        %p296 = pneg %p129
        %p297 = pneg %p153
        %p298 = pneg %p150
        %p299 = pneg %p181
        %p300 = pneg %p178
        %s301 = sand.u32 %s168, 1
        %s302 = scalar_lea.sflag [#allocation4], %s301
        %s303 = sand.u32 %s168, 1
        %s304 = smul.addr %s303, 32
        %s305 = scalar_lea.vmem [#allocation7], %s304
        %s306 = sadd.s32 %s30, 1
        %v307 = vld [vmem:[%s2] sm:$0xf]
        %v308 = vld [vmem:[%s3] sm:$0xf]
        %v309 = vld [vmem:[%s4] sm:$0xf]
        %v310 = vld [vmem:[%s265] sm:$0xff]
        %v311 = vld [vmem:[%s265 + $0x8] sm:$0xff]
        %v312 = vld [vmem:[%s265 + $0x10] sm:$0xff]
        %v313 = vld [vmem:[%s265 + $0x18] sm:$0xff]
        %v314 = vld [vmem:[%s274] sm:$0xff]
        %v315 = vld [vmem:[%s274 + $0x8] sm:$0xff]
        %v316 = vld [vmem:[%s274 + $0x10] sm:$0xff]
        %v317 = vld [vmem:[%s274 + $0x18] sm:$0xff]
        %v322 = vrot.slane %v315, 7
        %vm323 = vcmask 1041409
        %v324 = vsel %vm323, %v322, %v314
        %v325 = vrot.slane %v316, 6
        %vm326 = vcmask 1042434
        %v327 = vsel %vm326, %v325, %v324
        %v328 = vrot.slane %v317, 5
        %vm329 = vcmask 1043459
        %v330 = vsel %vm329, %v328, %v327
        %331 = vrot.lane.b32.xlu0 %v330, 120
        %v332 = vpop.permute.xlu0 %331
        %vm333 = vcmask 31744
        %v335 = vsel %vm333, %v308, 0
        %vm337 = vcmask 1043456
        %v338 = vsel %vm337, %v332, 0
        %340 = vmatprep.subr.mxu0 0.0
        %341 = vmatpush1.msra.mxu0 %v338
        %342 = vmatprep.subr.mxu0 0.0
        %343 = vmatpush1.msra.mxu0 0.0
        %344 = vmatprep.subr.mxu0 0.0
        %345 = vmatpush1.msra.mxu0 0.0
        %346 = vmatprep.subr.mxu0 0.0
        %347 = vmatpush1.msra.mxu0 0.0
        %348 = vmatprep.subr.mxu0 0.0
        %349 = vmatpush1.msra.mxu0 0.0
        %350 = vmatprep.subr.mxu0 0.0
        %351 = vmatpush1.msra.mxu0 0.0
        %352 = vmatprep.subr.mxu0 0.0
        %353 = vmatpush1.msra.mxu0 0.0
        %354 = vmatprep.subr.mxu0 0.0
        %355 = vmatpush1.msra.mxu0 0.0
        %356 = vmatprep.subr.mxu0 0.0
        %357 = vmatpush1.msra.mxu0 0.0
        %358 = vmatprep.subr.mxu0 0.0
        %359 = vmatpush1.msra.mxu0 0.0
        %360 = vmatprep.subr.mxu0 0.0
        %361 = vmatpush1.msra.mxu0 0.0
        %362 = vmatprep.subr.mxu0 0.0
        %363 = vmatpush1.msra.mxu0 0.0
        %364 = vmatprep.subr.mxu0 0.0
        %365 = vmatpush1.msra.mxu0 0.0
        %366 = vmatprep.subr.mxu0 0.0
        %367 = vmatpush1.msra.mxu0 0.0
        %368 = vmatprep.subr.mxu0 0.0
        %369 = vmatpush1.msra.mxu0 0.0
        %370 = vmatprep.subr.mxu0 0.0
        %371 = vmatpush1.msra.mxu0 0.0
        %372 = vmatprep.subr.mxu0 0.0
        %373 = vmatpush1.msra.mxu0 0.0
        %374 = vmatprep.subr.mxu0 0.0
        %375 = vmatpush1.msra.mxu0 0.0
        %376 = vmatprep.subr.mxu0 0.0
        %377 = vmatpush1.msra.mxu0 0.0
        %378 = vmatprep.subr.mxu0 0.0
        %379 = vmatpush1.msra.mxu0 0.0
        %380 = vmatprep.subr.mxu0 0.0
        %381 = vmatpush1.msra.mxu0 0.0
        %382 = vmatprep.subr.mxu0 0.0
        %383 = vmatpush1.msra.mxu0 0.0
        %384 = vmatprep.subr.mxu0 0.0
        %385 = vmatpush1.msra.mxu0 0.0
        %386 = vmatprep.subr.mxu0 0.0
        %387 = vmatpush1.msra.mxu0 0.0
        %388 = vmatprep.subr.mxu0 0.0
        %389 = vmatpush1.msra.mxu0 0.0
        %390 = vmatprep.subr.mxu0 0.0
        %391 = vmatpush1.msra.mxu0 0.0
        %392 = vmatprep.subr.mxu0 0.0
        %393 = vmatpush1.msra.mxu0 0.0
        %394 = vmatprep.subr.mxu0 0.0
        %395 = vmatpush1.msra.mxu0 0.0
        %396 = vmatprep.subr.mxu0 0.0
        %397 = vmatpush1.msra.mxu0 0.0
        %398 = vmatprep.subr.mxu0 0.0
        %399 = vmatpush1.msra.mxu0 0.0
        %400 = vmatprep.subr.mxu0 0.0
        %401 = vmatpush1.msra.mxu0 0.0
        %402 = vmatprep.subr.mxu0 0.0
        %403 = vmatpush1.msra.mxu0 0.0
        %404 = vmatprep.mubr.f32.mxu0 0.0
        %405 = vmatmul.mubr.f32.gmra.mrb[0].mxu0 %v335
        %v406 = vpop.f32.mrb[0].mxu0
        %v407 = vadd.f32 0.0, %v406
        %v408 = vpop.f32.mrb[0].mxu0
        %409 = vdwg.mxu0
        %v414 = vrot.slane %v311, 7
        %v415 = vsel %vm323, %v414, %v310
        %v416 = vrot.slane %v312, 6
        %v417 = vsel %vm326, %v416, %v415
        %v418 = vrot.slane %v313, 5
        %v419 = vsel %vm329, %v418, %v417
        %v421 = vsel %vm333, %v307, 0
        %v423 = vsel %vm337, %v419, 0
        %425 = vmatprep.subr.mxu0 0.0
        %426 = vmatpush1.msra.mxu0 %v423
        %427 = vmatprep.subr.mxu0 0.0
        %428 = vmatpush1.msra.mxu0 0.0
        %429 = vmatprep.subr.mxu0 0.0
        %430 = vmatpush1.msra.mxu0 0.0
        %431 = vmatprep.subr.mxu0 0.0
        %432 = vmatpush1.msra.mxu0 0.0
        %433 = vmatprep.subr.mxu0 0.0
        %434 = vmatpush1.msra.mxu0 0.0
        %435 = vmatprep.subr.mxu0 0.0
        %436 = vmatpush1.msra.mxu0 0.0
        %437 = vmatprep.subr.mxu0 0.0
        %438 = vmatpush1.msra.mxu0 0.0
        %439 = vmatprep.subr.mxu0 0.0
        %440 = vmatpush1.msra.mxu0 0.0
        %441 = vmatprep.subr.mxu0 0.0
        %442 = vmatpush1.msra.mxu0 0.0
        %443 = vmatprep.subr.mxu0 0.0
        %444 = vmatpush1.msra.mxu0 0.0
        %445 = vmatprep.subr.mxu0 0.0
        %446 = vmatpush1.msra.mxu0 0.0
        %447 = vmatprep.subr.mxu0 0.0
        %448 = vmatpush1.msra.mxu0 0.0
        %449 = vmatprep.subr.mxu0 0.0
        %450 = vmatpush1.msra.mxu0 0.0
        %451 = vmatprep.subr.mxu0 0.0
        %452 = vmatpush1.msra.mxu0 0.0
        %453 = vmatprep.subr.mxu0 0.0
        %454 = vmatpush1.msra.mxu0 0.0
        %455 = vmatprep.subr.mxu0 0.0
        %456 = vmatpush1.msra.mxu0 0.0
        %457 = vmatprep.subr.mxu0 0.0
        %458 = vmatpush1.msra.mxu0 0.0
        %459 = vmatprep.subr.mxu0 0.0
        %460 = vmatpush1.msra.mxu0 0.0
        %461 = vmatprep.subr.mxu0 0.0
        %462 = vmatpush1.msra.mxu0 0.0
        %463 = vmatprep.subr.mxu0 0.0
        %464 = vmatpush1.msra.mxu0 0.0
        %465 = vmatprep.subr.mxu0 0.0
        %466 = vmatpush1.msra.mxu0 0.0
        %467 = vmatprep.subr.mxu0 0.0
        %468 = vmatpush1.msra.mxu0 0.0
        %469 = vmatprep.subr.mxu0 0.0
        %470 = vmatpush1.msra.mxu0 0.0
        %471 = vmatprep.subr.mxu0 0.0
        %472 = vmatpush1.msra.mxu0 0.0
        %473 = vmatprep.subr.mxu0 0.0
        %474 = vmatpush1.msra.mxu0 0.0
        %475 = vmatprep.subr.mxu0 0.0
        %476 = vmatpush1.msra.mxu0 0.0
        %477 = vmatprep.subr.mxu0 0.0
        %478 = vmatpush1.msra.mxu0 0.0
        %479 = vmatprep.subr.mxu0 0.0
        %480 = vmatpush1.msra.mxu0 0.0
        %481 = vmatprep.subr.mxu0 0.0
        %482 = vmatpush1.msra.mxu0 0.0
        %483 = vmatprep.subr.mxu0 0.0
        %484 = vmatpush1.msra.mxu0 0.0
        %485 = vmatprep.subr.mxu0 0.0
        %486 = vmatpush1.msra.mxu0 0.0
        %487 = vmatprep.subr.mxu0 0.0
        %488 = vmatpush1.msra.mxu0 0.0
        %489 = vmatprep.mubr.f32.mxu0 0.0
        %490 = vmatmul.mubr.f32.gmra.mrb[0].mxu0 %v421
        %v491 = vpop.f32.mrb[0].mxu0
        %v492 = vadd.f32 %v407, %v491
        %v493 = vpop.f32.mrb[0].mxu0
        %494 = vdwg.mxu0
        %496 = vset.pattern.permute.xlu0 0
        %497 = vperm.xlu0 %496, %v309
        %v498 = vpop.permute.xlu0 %497
        %v500 = vadd.f32 %v492, %v498
        %v503 = vunpack.c.l.s4 1966171168
        %v504 = vunpack.c.0.s8 %v503
        %v505 = vlaneseq
        %v506 = vshrl.u32 %v505, 7
        %v507 = vsub.s32 %v504, %v506
        %v508 = vrot.slane %v500, %v507
        %v509 = vcombine.high %v508, %v508
        %v511 = vunpack.c.l.s4 1966171168
        %v512 = vunpack.c.0.s8 %v511
        %v513 = vlaneseq
        %v514 = vshrl.u32 %v513, 7
        %v515 = vsub.s32 %v512, %v514
        %v516 = vrot.slane %v508, %v515
        %v518 = vunpack.c.l.s4 1966171168
        %v519 = vunpack.c.0.s8 %v518
        %v520 = vlaneseq
        %v521 = vshrl.u32 %v520, 7
        %v522 = vsub.s32 %v519, %v521
        %v523 = vrot.slane %v509, %v522
        %v524 = vcombine.high %v516, %v516
        %v525 = vcombine.high %v523, %v523
        %vm530 = vcmask 122880
        %531 = vst.msk [vmem:[%s305] sm:$0x1] %vm530, %v516
        %532 = vst.msk [vmem:[%s305 + $0x8] sm:$0x1] %vm530, %v523
        %533 = vst.msk [vmem:[%s305 + $0x10] sm:$0x1] %vm530, %v524
        %534 = vst.msk [vmem:[%s305 + $0x18] sm:$0x1] %vm530, %v525
        %v535 = vrot.slane %v314, 1
        %v536 = vsel %vm323, %v315, %v535
        %v537 = vrot.slane %v316, 7
        %v538 = vsel %vm326, %v537, %v536
        %v539 = vrot.slane %v317, 6
        %v540 = vsel %vm329, %v539, %v538
        %541 = vrot.lane.b32.xlu0 %v540, 120
        %v542 = vpop.permute.xlu0 %541
        %v543 = vsel %vm337, %v542, 0
        %545 = vmatprep.subr.mxu0 0.0
        %546 = vmatpush1.msra.mxu0 %v543
        %547 = vmatprep.subr.mxu0 0.0
        %548 = vmatpush1.msra.mxu0 0.0
        %549 = vmatprep.subr.mxu0 0.0
        %550 = vmatpush1.msra.mxu0 0.0
        %551 = vmatprep.subr.mxu0 0.0
        %552 = vmatpush1.msra.mxu0 0.0
        %553 = vmatprep.subr.mxu0 0.0
        %554 = vmatpush1.msra.mxu0 0.0
        %555 = vmatprep.subr.mxu0 0.0
        %556 = vmatpush1.msra.mxu0 0.0
        %557 = vmatprep.subr.mxu0 0.0
        %558 = vmatpush1.msra.mxu0 0.0
        %559 = vmatprep.subr.mxu0 0.0
        %560 = vmatpush1.msra.mxu0 0.0
        %561 = vmatprep.subr.mxu0 0.0
        %562 = vmatpush1.msra.mxu0 0.0
        %563 = vmatprep.subr.mxu0 0.0
        %564 = vmatpush1.msra.mxu0 0.0
        %565 = vmatprep.subr.mxu0 0.0
        %566 = vmatpush1.msra.mxu0 0.0
        %567 = vmatprep.subr.mxu0 0.0
        %568 = vmatpush1.msra.mxu0 0.0
        %569 = vmatprep.subr.mxu0 0.0
        %570 = vmatpush1.msra.mxu0 0.0
        %571 = vmatprep.subr.mxu0 0.0
        %572 = vmatpush1.msra.mxu0 0.0
        %573 = vmatprep.subr.mxu0 0.0
        %574 = vmatpush1.msra.mxu0 0.0
        %575 = vmatprep.subr.mxu0 0.0
        %576 = vmatpush1.msra.mxu0 0.0
        %577 = vmatprep.subr.mxu0 0.0
        %578 = vmatpush1.msra.mxu0 0.0
        %579 = vmatprep.subr.mxu0 0.0
        %580 = vmatpush1.msra.mxu0 0.0
        %581 = vmatprep.subr.mxu0 0.0
        %582 = vmatpush1.msra.mxu0 0.0
        %583 = vmatprep.subr.mxu0 0.0
        %584 = vmatpush1.msra.mxu0 0.0
        %585 = vmatprep.subr.mxu0 0.0
        %586 = vmatpush1.msra.mxu0 0.0
        %587 = vmatprep.subr.mxu0 0.0
        %588 = vmatpush1.msra.mxu0 0.0
        %589 = vmatprep.subr.mxu0 0.0
        %590 = vmatpush1.msra.mxu0 0.0
        %591 = vmatprep.subr.mxu0 0.0
        %592 = vmatpush1.msra.mxu0 0.0
        %593 = vmatprep.subr.mxu0 0.0
        %594 = vmatpush1.msra.mxu0 0.0
        %595 = vmatprep.subr.mxu0 0.0
        %596 = vmatpush1.msra.mxu0 0.0
        %597 = vmatprep.subr.mxu0 0.0
        %598 = vmatpush1.msra.mxu0 0.0
        %599 = vmatprep.subr.mxu0 0.0
        %600 = vmatpush1.msra.mxu0 0.0
        %601 = vmatprep.subr.mxu0 0.0
        %602 = vmatpush1.msra.mxu0 0.0
        %603 = vmatprep.subr.mxu0 0.0
        %604 = vmatpush1.msra.mxu0 0.0
        %605 = vmatprep.subr.mxu0 0.0
        %606 = vmatpush1.msra.mxu0 0.0
        %607 = vmatprep.subr.mxu0 0.0
        %608 = vmatpush1.msra.mxu0 0.0
        %609 = vmatprep.mubr.f32.mxu0 0.0
        %610 = vmatmul.mubr.f32.gmra.mrb[0].mxu0 %v335
        %v611 = vpop.f32.mrb[0].mxu0
        %v612 = vadd.f32 0.0, %v611
        %v613 = vpop.f32.mrb[0].mxu0
        %614 = vdwg.mxu0
        %v615 = vrot.slane %v310, 1
        %v616 = vsel %vm323, %v311, %v615
        %v617 = vrot.slane %v312, 7
        %v618 = vsel %vm326, %v617, %v616
        %v619 = vrot.slane %v313, 6
        %v620 = vsel %vm329, %v619, %v618
        %v621 = vsel %vm337, %v620, 0
        %623 = vmatprep.subr.mxu0 0.0
        %624 = vmatpush1.msra.mxu0 %v621
        %625 = vmatprep.subr.mxu0 0.0
        %626 = vmatpush1.msra.mxu0 0.0
        %627 = vmatprep.subr.mxu0 0.0
        %628 = vmatpush1.msra.mxu0 0.0
        %629 = vmatprep.subr.mxu0 0.0
        %630 = vmatpush1.msra.mxu0 0.0
        %631 = vmatprep.subr.mxu0 0.0
        %632 = vmatpush1.msra.mxu0 0.0
        %633 = vmatprep.subr.mxu0 0.0
        %634 = vmatpush1.msra.mxu0 0.0
        %635 = vmatprep.subr.mxu0 0.0
        %636 = vmatpush1.msra.mxu0 0.0
        %637 = vmatprep.subr.mxu0 0.0
        %638 = vmatpush1.msra.mxu0 0.0
        %639 = vmatprep.subr.mxu0 0.0
        %640 = vmatpush1.msra.mxu0 0.0
        %641 = vmatprep.subr.mxu0 0.0
        %642 = vmatpush1.msra.mxu0 0.0
        %643 = vmatprep.subr.mxu0 0.0
        %644 = vmatpush1.msra.mxu0 0.0
        %645 = vmatprep.subr.mxu0 0.0
        %646 = vmatpush1.msra.mxu0 0.0
        %647 = vmatprep.subr.mxu0 0.0
        %648 = vmatpush1.msra.mxu0 0.0
        %649 = vmatprep.subr.mxu0 0.0
        %650 = vmatpush1.msra.mxu0 0.0
        %651 = vmatprep.subr.mxu0 0.0
        %652 = vmatpush1.msra.mxu0 0.0
        %653 = vmatprep.subr.mxu0 0.0
        %654 = vmatpush1.msra.mxu0 0.0
        %655 = vmatprep.subr.mxu0 0.0
        %656 = vmatpush1.msra.mxu0 0.0
        %657 = vmatprep.subr.mxu0 0.0
        %658 = vmatpush1.msra.mxu0 0.0
        %659 = vmatprep.subr.mxu0 0.0
        %660 = vmatpush1.msra.mxu0 0.0
        %661 = vmatprep.subr.mxu0 0.0
        %662 = vmatpush1.msra.mxu0 0.0
        %663 = vmatprep.subr.mxu0 0.0
        %664 = vmatpush1.msra.mxu0 0.0
        %665 = vmatprep.subr.mxu0 0.0
        %666 = vmatpush1.msra.mxu0 0.0
        %667 = vmatprep.subr.mxu0 0.0
        %668 = vmatpush1.msra.mxu0 0.0
        %669 = vmatprep.subr.mxu0 0.0
        %670 = vmatpush1.msra.mxu0 0.0
        %671 = vmatprep.subr.mxu0 0.0
        %672 = vmatpush1.msra.mxu0 0.0
        %673 = vmatprep.subr.mxu0 0.0
        %674 = vmatpush1.msra.mxu0 0.0
        %675 = vmatprep.subr.mxu0 0.0
        %676 = vmatpush1.msra.mxu0 0.0
        %677 = vmatprep.subr.mxu0 0.0
        %678 = vmatpush1.msra.mxu0 0.0
        %679 = vmatprep.subr.mxu0 0.0
        %680 = vmatpush1.msra.mxu0 0.0
        %681 = vmatprep.subr.mxu0 0.0
        %682 = vmatpush1.msra.mxu0 0.0
        %683 = vmatprep.subr.mxu0 0.0
        %684 = vmatpush1.msra.mxu0 0.0
        %685 = vmatprep.subr.mxu0 0.0
        %686 = vmatpush1.msra.mxu0 0.0
        %687 = vmatprep.mubr.f32.mxu0 0.0
        %688 = vmatmul.mubr.f32.gmra.mrb[0].mxu0 %v421
        %v689 = vpop.f32.mrb[0].mxu0
        %v690 = vadd.f32 %v612, %v689
        %v691 = vpop.f32.mrb[0].mxu0
        %692 = vdwg.mxu0
        %v693 = vadd.f32 %v690, %v498
        %v696 = vunpack.c.l.s4 1966171168
        %v697 = vunpack.c.0.s8 %v696
        %v698 = vlaneseq
        %v699 = vshrl.u32 %v698, 7
        %v700 = vsub.s32 %v697, %v699
        %v701 = vrot.slane %v693, %v700
        %v702 = vcombine.high %v701, %v701
        %v704 = vunpack.c.l.s4 1966171168
        %v705 = vunpack.c.0.s8 %v704
        %v706 = vlaneseq
        %v707 = vshrl.u32 %v706, 7
        %v708 = vsub.s32 %v705, %v707
        %v709 = vrot.slane %v701, %v708
        %v711 = vunpack.c.l.s4 1966171168
        %v712 = vunpack.c.0.s8 %v711
        %v713 = vlaneseq
        %v714 = vshrl.u32 %v713, 7
        %v715 = vsub.s32 %v712, %v714
        %v716 = vrot.slane %v702, %v715
        %v717 = vcombine.high %v709, %v709
        %v718 = vcombine.high %v716, %v716
        %723 = vst.msk [vmem:[%s305 + $0x1] sm:$0x1] %vm530, %v709
        %724 = vst.msk [vmem:[%s305 + $0x9] sm:$0x1] %vm530, %v716
        %725 = vst.msk [vmem:[%s305 + $0x11] sm:$0x1] %vm530, %v717
        %726 = vst.msk [vmem:[%s305 + $0x19] sm:$0x1] %vm530, %v718
        %v727 = vrot.slane %v314, 2
        %v728 = vrot.slane %v315, 1
        %v729 = vsel %vm323, %v728, %v727
        %v730 = vsel %vm326, %v316, %v729
        %v731 = vrot.slane %v317, 7
        %v732 = vsel %vm329, %v731, %v730
        %733 = vrot.lane.b32.xlu0 %v732, 120
        %v734 = vpop.permute.xlu0 %733
        %v735 = vsel %vm337, %v734, 0
        %737 = vmatprep.subr.mxu0 0.0
        %738 = vmatpush1.msra.mxu0 %v735
        %739 = vmatprep.subr.mxu0 0.0
        %740 = vmatpush1.msra.mxu0 0.0
        %741 = vmatprep.subr.mxu0 0.0
        %742 = vmatpush1.msra.mxu0 0.0
        %743 = vmatprep.subr.mxu0 0.0
        %744 = vmatpush1.msra.mxu0 0.0
        %745 = vmatprep.subr.mxu0 0.0
        %746 = vmatpush1.msra.mxu0 0.0
        %747 = vmatprep.subr.mxu0 0.0
        %748 = vmatpush1.msra.mxu0 0.0
        %749 = vmatprep.subr.mxu0 0.0
        %750 = vmatpush1.msra.mxu0 0.0
        %751 = vmatprep.subr.mxu0 0.0
        %752 = vmatpush1.msra.mxu0 0.0
        %753 = vmatprep.subr.mxu0 0.0
        %754 = vmatpush1.msra.mxu0 0.0
        %755 = vmatprep.subr.mxu0 0.0
        %756 = vmatpush1.msra.mxu0 0.0
        %757 = vmatprep.subr.mxu0 0.0
        %758 = vmatpush1.msra.mxu0 0.0
        %759 = vmatprep.subr.mxu0 0.0
        %760 = vmatpush1.msra.mxu0 0.0
        %761 = vmatprep.subr.mxu0 0.0
        %762 = vmatpush1.msra.mxu0 0.0
        %763 = vmatprep.subr.mxu0 0.0
        %764 = vmatpush1.msra.mxu0 0.0
        %765 = vmatprep.subr.mxu0 0.0
        %766 = vmatpush1.msra.mxu0 0.0
        %767 = vmatprep.subr.mxu0 0.0
        %768 = vmatpush1.msra.mxu0 0.0
        %769 = vmatprep.subr.mxu0 0.0
        %770 = vmatpush1.msra.mxu0 0.0
        %771 = vmatprep.subr.mxu0 0.0
        %772 = vmatpush1.msra.mxu0 0.0
        %773 = vmatprep.subr.mxu0 0.0
        %774 = vmatpush1.msra.mxu0 0.0
        %775 = vmatprep.subr.mxu0 0.0
        %776 = vmatpush1.msra.mxu0 0.0
        %777 = vmatprep.subr.mxu0 0.0
        %778 = vmatpush1.msra.mxu0 0.0
        %779 = vmatprep.subr.mxu0 0.0
        %780 = vmatpush1.msra.mxu0 0.0
        %781 = vmatprep.subr.mxu0 0.0
        %782 = vmatpush1.msra.mxu0 0.0
        %783 = vmatprep.subr.mxu0 0.0
        %784 = vmatpush1.msra.mxu0 0.0
        %785 = vmatprep.subr.mxu0 0.0
        %786 = vmatpush1.msra.mxu0 0.0
        %787 = vmatprep.subr.mxu0 0.0
        %788 = vmatpush1.msra.mxu0 0.0
        %789 = vmatprep.subr.mxu0 0.0
        %790 = vmatpush1.msra.mxu0 0.0
        %791 = vmatprep.subr.mxu0 0.0
        %792 = vmatpush1.msra.mxu0 0.0
        %793 = vmatprep.subr.mxu0 0.0
        %794 = vmatpush1.msra.mxu0 0.0
        %795 = vmatprep.subr.mxu0 0.0
        %796 = vmatpush1.msra.mxu0 0.0
        %797 = vmatprep.subr.mxu0 0.0
        %798 = vmatpush1.msra.mxu0 0.0
        %799 = vmatprep.subr.mxu0 0.0
        %800 = vmatpush1.msra.mxu0 0.0
        %801 = vmatprep.mubr.f32.mxu0 0.0
        %802 = vmatmul.mubr.f32.gmra.mrb[0].mxu0 %v335
        %v803 = vpop.f32.mrb[0].mxu0
        %v804 = vadd.f32 0.0, %v803
        %v805 = vpop.f32.mrb[0].mxu0
        %806 = vdwg.mxu0
        %v807 = vrot.slane %v310, 2
        %v808 = vrot.slane %v311, 1
        %v809 = vsel %vm323, %v808, %v807
        %v810 = vsel %vm326, %v312, %v809
        %v811 = vrot.slane %v313, 7
        %v812 = vsel %vm329, %v811, %v810
        %v813 = vsel %vm337, %v812, 0
        %815 = vmatprep.subr.mxu0 0.0
        %816 = vmatpush1.msra.mxu0 %v813
        %817 = vmatprep.subr.mxu0 0.0
        %818 = vmatpush1.msra.mxu0 0.0
        %819 = vmatprep.subr.mxu0 0.0
        %820 = vmatpush1.msra.mxu0 0.0
        %821 = vmatprep.subr.mxu0 0.0
        %822 = vmatpush1.msra.mxu0 0.0
        %823 = vmatprep.subr.mxu0 0.0
        %824 = vmatpush1.msra.mxu0 0.0
        %825 = vmatprep.subr.mxu0 0.0
        %826 = vmatpush1.msra.mxu0 0.0
        %827 = vmatprep.subr.mxu0 0.0
        %828 = vmatpush1.msra.mxu0 0.0
        %829 = vmatprep.subr.mxu0 0.0
        %830 = vmatpush1.msra.mxu0 0.0
        %831 = vmatprep.subr.mxu0 0.0
        %832 = vmatpush1.msra.mxu0 0.0
        %833 = vmatprep.subr.mxu0 0.0
        %834 = vmatpush1.msra.mxu0 0.0
        %835 = vmatprep.subr.mxu0 0.0
        %836 = vmatpush1.msra.mxu0 0.0
        %837 = vmatprep.subr.mxu0 0.0
        %838 = vmatpush1.msra.mxu0 0.0
        %839 = vmatprep.subr.mxu0 0.0
        %840 = vmatpush1.msra.mxu0 0.0
        %841 = vmatprep.subr.mxu0 0.0
        %842 = vmatpush1.msra.mxu0 0.0
        %843 = vmatprep.subr.mxu0 0.0
        %844 = vmatpush1.msra.mxu0 0.0
        %845 = vmatprep.subr.mxu0 0.0
        %846 = vmatpush1.msra.mxu0 0.0
        %847 = vmatprep.subr.mxu0 0.0
        %848 = vmatpush1.msra.mxu0 0.0
        %849 = vmatprep.subr.mxu0 0.0
        %850 = vmatpush1.msra.mxu0 0.0
        %851 = vmatprep.subr.mxu0 0.0
        %852 = vmatpush1.msra.mxu0 0.0
        %853 = vmatprep.subr.mxu0 0.0
        %854 = vmatpush1.msra.mxu0 0.0
        %855 = vmatprep.subr.mxu0 0.0
        %856 = vmatpush1.msra.mxu0 0.0
        %857 = vmatprep.subr.mxu0 0.0
        %858 = vmatpush1.msra.mxu0 0.0
        %859 = vmatprep.subr.mxu0 0.0
        %860 = vmatpush1.msra.mxu0 0.0
        %861 = vmatprep.subr.mxu0 0.0
        %862 = vmatpush1.msra.mxu0 0.0
        %863 = vmatprep.subr.mxu0 0.0
        %864 = vmatpush1.msra.mxu0 0.0
        %865 = vmatprep.subr.mxu0 0.0
        %866 = vmatpush1.msra.mxu0 0.0
        %867 = vmatprep.subr.mxu0 0.0
        %868 = vmatpush1.msra.mxu0 0.0
        %869 = vmatprep.subr.mxu0 0.0
        %870 = vmatpush1.msra.mxu0 0.0
        %871 = vmatprep.subr.mxu0 0.0
        %872 = vmatpush1.msra.mxu0 0.0
        %873 = vmatprep.subr.mxu0 0.0
        %874 = vmatpush1.msra.mxu0 0.0
        %875 = vmatprep.subr.mxu0 0.0
        %876 = vmatpush1.msra.mxu0 0.0
        %877 = vmatprep.subr.mxu0 0.0
        %878 = vmatpush1.msra.mxu0 0.0
        %879 = vmatprep.mubr.f32.mxu0 0.0
        %880 = vmatmul.mubr.f32.gmra.mrb[0].mxu0 %v421
        %v881 = vpop.f32.mrb[0].mxu0
        %v882 = vadd.f32 %v804, %v881
        %v883 = vpop.f32.mrb[0].mxu0
        %884 = vdwg.mxu0
        %v885 = vadd.f32 %v882, %v498
        %v888 = vunpack.c.l.s4 1966171168
        %v889 = vunpack.c.0.s8 %v888
        %v890 = vlaneseq
        %v891 = vshrl.u32 %v890, 7
        %v892 = vsub.s32 %v889, %v891
        %v893 = vrot.slane %v885, %v892
        %v894 = vcombine.high %v893, %v893
        %v896 = vunpack.c.l.s4 1966171168
        %v897 = vunpack.c.0.s8 %v896
        %v898 = vlaneseq
        %v899 = vshrl.u32 %v898, 7
        %v900 = vsub.s32 %v897, %v899
        %v901 = vrot.slane %v893, %v900
        %v903 = vunpack.c.l.s4 1966171168
        %v904 = vunpack.c.0.s8 %v903
        %v905 = vlaneseq
        %v906 = vshrl.u32 %v905, 7
        %v907 = vsub.s32 %v904, %v906
        %v908 = vrot.slane %v894, %v907
        %v909 = vcombine.high %v901, %v901
        %v910 = vcombine.high %v908, %v908
        %915 = vst.msk [vmem:[%s305 + $0x2] sm:$0x1] %vm530, %v901
        %916 = vst.msk [vmem:[%s305 + $0xa] sm:$0x1] %vm530, %v908
        %917 = vst.msk [vmem:[%s305 + $0x12] sm:$0x1] %vm530, %v909
        %918 = vst.msk [vmem:[%s305 + $0x1a] sm:$0x1] %vm530, %v910
        %v919 = vrot.slane %v314, 3
        %v920 = vrot.slane %v315, 2
        %v921 = vsel %vm323, %v920, %v919
        %v922 = vrot.slane %v316, 1
        %v923 = vsel %vm326, %v922, %v921
        %v924 = vsel %vm329, %v317, %v923
        %925 = vrot.lane.b32.xlu0 %v924, 120
        %v926 = vpop.permute.xlu0 %925
        %v927 = vsel %vm337, %v926, 0
        %929 = vmatprep.subr.mxu0 0.0
        %930 = vmatpush1.msra.mxu0 %v927
        %931 = vmatprep.subr.mxu0 0.0
        %932 = vmatpush1.msra.mxu0 0.0
        %933 = vmatprep.subr.mxu0 0.0
        %934 = vmatpush1.msra.mxu0 0.0
        %935 = vmatprep.subr.mxu0 0.0
        %936 = vmatpush1.msra.mxu0 0.0
        %937 = vmatprep.subr.mxu0 0.0
        %938 = vmatpush1.msra.mxu0 0.0
        %939 = vmatprep.subr.mxu0 0.0
        %940 = vmatpush1.msra.mxu0 0.0
        %941 = vmatprep.subr.mxu0 0.0
        %942 = vmatpush1.msra.mxu0 0.0
        %943 = vmatprep.subr.mxu0 0.0
        %944 = vmatpush1.msra.mxu0 0.0
        %945 = vmatprep.subr.mxu0 0.0
        %946 = vmatpush1.msra.mxu0 0.0
        %947 = vmatprep.subr.mxu0 0.0
        %948 = vmatpush1.msra.mxu0 0.0
        %949 = vmatprep.subr.mxu0 0.0
        %950 = vmatpush1.msra.mxu0 0.0
        %951 = vmatprep.subr.mxu0 0.0
        %952 = vmatpush1.msra.mxu0 0.0
        %953 = vmatprep.subr.mxu0 0.0
        %954 = vmatpush1.msra.mxu0 0.0
        %955 = vmatprep.subr.mxu0 0.0
        %956 = vmatpush1.msra.mxu0 0.0
        %957 = vmatprep.subr.mxu0 0.0
        %958 = vmatpush1.msra.mxu0 0.0
        %959 = vmatprep.subr.mxu0 0.0
        %960 = vmatpush1.msra.mxu0 0.0
        %961 = vmatprep.subr.mxu0 0.0
        %962 = vmatpush1.msra.mxu0 0.0
        %963 = vmatprep.subr.mxu0 0.0
        %964 = vmatpush1.msra.mxu0 0.0
        %965 = vmatprep.subr.mxu0 0.0
        %966 = vmatpush1.msra.mxu0 0.0
        %967 = vmatprep.subr.mxu0 0.0
        %968 = vmatpush1.msra.mxu0 0.0
        %969 = vmatprep.subr.mxu0 0.0
        %970 = vmatpush1.msra.mxu0 0.0
        %971 = vmatprep.subr.mxu0 0.0
        %972 = vmatpush1.msra.mxu0 0.0
        %973 = vmatprep.subr.mxu0 0.0
        %974 = vmatpush1.msra.mxu0 0.0
        %975 = vmatprep.subr.mxu0 0.0
        %976 = vmatpush1.msra.mxu0 0.0
        %977 = vmatprep.subr.mxu0 0.0
        %978 = vmatpush1.msra.mxu0 0.0
        %979 = vmatprep.subr.mxu0 0.0
        %980 = vmatpush1.msra.mxu0 0.0
        %981 = vmatprep.subr.mxu0 0.0
        %982 = vmatpush1.msra.mxu0 0.0
        %983 = vmatprep.subr.mxu0 0.0
        %984 = vmatpush1.msra.mxu0 0.0
        %985 = vmatprep.subr.mxu0 0.0
        %986 = vmatpush1.msra.mxu0 0.0
        %987 = vmatprep.subr.mxu0 0.0
        %988 = vmatpush1.msra.mxu0 0.0
        %989 = vmatprep.subr.mxu0 0.0
        %990 = vmatpush1.msra.mxu0 0.0
        %991 = vmatprep.subr.mxu0 0.0
        %992 = vmatpush1.msra.mxu0 0.0
        %993 = vmatprep.mubr.f32.mxu0 0.0
        %994 = vmatmul.mubr.f32.gmra.mrb[0].mxu0 %v335
        %v995 = vpop.f32.mrb[0].mxu0
        %v996 = vadd.f32 0.0, %v995
        %v997 = vpop.f32.mrb[0].mxu0
        %998 = vdwg.mxu0
        %v999 = vrot.slane %v310, 3
        %v1000 = vrot.slane %v311, 2
        %v1001 = vsel %vm323, %v1000, %v999
        %v1002 = vrot.slane %v312, 1
        %v1003 = vsel %vm326, %v1002, %v1001
        %v1004 = vsel %vm329, %v313, %v1003
        %v1005 = vsel %vm337, %v1004, 0
        %1007 = vmatprep.subr.mxu0 0.0
        %1008 = vmatpush1.msra.mxu0 %v1005
        %1009 = vmatprep.subr.mxu0 0.0
        %1010 = vmatpush1.msra.mxu0 0.0
        %1011 = vmatprep.subr.mxu0 0.0
        %1012 = vmatpush1.msra.mxu0 0.0
        %1013 = vmatprep.subr.mxu0 0.0
        %1014 = vmatpush1.msra.mxu0 0.0
        %1015 = vmatprep.subr.mxu0 0.0
        %1016 = vmatpush1.msra.mxu0 0.0
        %1017 = vmatprep.subr.mxu0 0.0
        %1018 = vmatpush1.msra.mxu0 0.0
        %1019 = vmatprep.subr.mxu0 0.0
        %1020 = vmatpush1.msra.mxu0 0.0
        %1021 = vmatprep.subr.mxu0 0.0
        %1022 = vmatpush1.msra.mxu0 0.0
        %1023 = vmatprep.subr.mxu0 0.0
        %1024 = vmatpush1.msra.mxu0 0.0
        %1025 = vmatprep.subr.mxu0 0.0
        %1026 = vmatpush1.msra.mxu0 0.0
        %1027 = vmatprep.subr.mxu0 0.0
        %1028 = vmatpush1.msra.mxu0 0.0
        %1029 = vmatprep.subr.mxu0 0.0
        %1030 = vmatpush1.msra.mxu0 0.0
        %1031 = vmatprep.subr.mxu0 0.0
        %1032 = vmatpush1.msra.mxu0 0.0
        %1033 = vmatprep.subr.mxu0 0.0
        %1034 = vmatpush1.msra.mxu0 0.0
        %1035 = vmatprep.subr.mxu0 0.0
        %1036 = vmatpush1.msra.mxu0 0.0
        %1037 = vmatprep.subr.mxu0 0.0
        %1038 = vmatpush1.msra.mxu0 0.0
        %1039 = vmatprep.subr.mxu0 0.0
        %1040 = vmatpush1.msra.mxu0 0.0
        %1041 = vmatprep.subr.mxu0 0.0
        %1042 = vmatpush1.msra.mxu0 0.0
        %1043 = vmatprep.subr.mxu0 0.0
        %1044 = vmatpush1.msra.mxu0 0.0
        %1045 = vmatprep.subr.mxu0 0.0
        %1046 = vmatpush1.msra.mxu0 0.0
        %1047 = vmatprep.subr.mxu0 0.0
        %1048 = vmatpush1.msra.mxu0 0.0
        %1049 = vmatprep.subr.mxu0 0.0
        %1050 = vmatpush1.msra.mxu0 0.0
        %1051 = vmatprep.subr.mxu0 0.0
        %1052 = vmatpush1.msra.mxu0 0.0
        %1053 = vmatprep.subr.mxu0 0.0
        %1054 = vmatpush1.msra.mxu0 0.0
        %1055 = vmatprep.subr.mxu0 0.0
        %1056 = vmatpush1.msra.mxu0 0.0
        %1057 = vmatprep.subr.mxu0 0.0
        %1058 = vmatpush1.msra.mxu0 0.0
        %1059 = vmatprep.subr.mxu0 0.0
        %1060 = vmatpush1.msra.mxu0 0.0
        %1061 = vmatprep.subr.mxu0 0.0
        %1062 = vmatpush1.msra.mxu0 0.0
        %1063 = vmatprep.subr.mxu0 0.0
        %1064 = vmatpush1.msra.mxu0 0.0
        %1065 = vmatprep.subr.mxu0 0.0
        %1066 = vmatpush1.msra.mxu0 0.0
        %1067 = vmatprep.subr.mxu0 0.0
        %1068 = vmatpush1.msra.mxu0 0.0
        %1069 = vmatprep.subr.mxu0 0.0
        %1070 = vmatpush1.msra.mxu0 0.0
        %1071 = vmatprep.mubr.f32.mxu0 0.0
        %1072 = vmatmul.mubr.f32.gmra.mrb[0].mxu0 %v421
        %v1073 = vpop.f32.mrb[0].mxu0
        %v1074 = vadd.f32 %v996, %v1073
        %v1075 = vpop.f32.mrb[0].mxu0
        %1076 = vdwg.mxu0
        %v1077 = vadd.f32 %v1074, %v498
        %v1080 = vunpack.c.l.s4 1966171168
        %v1081 = vunpack.c.0.s8 %v1080
        %v1082 = vlaneseq
        %v1083 = vshrl.u32 %v1082, 7
        %v1084 = vsub.s32 %v1081, %v1083
        %v1085 = vrot.slane %v1077, %v1084
        %v1086 = vcombine.high %v1085, %v1085
        %v1088 = vunpack.c.l.s4 1966171168
        %v1089 = vunpack.c.0.s8 %v1088
        %v1090 = vlaneseq
        %v1091 = vshrl.u32 %v1090, 7
        %v1092 = vsub.s32 %v1089, %v1091
        %v1093 = vrot.slane %v1085, %v1092
        %v1095 = vunpack.c.l.s4 1966171168
        %v1096 = vunpack.c.0.s8 %v1095
        %v1097 = vlaneseq
        %v1098 = vshrl.u32 %v1097, 7
        %v1099 = vsub.s32 %v1096, %v1098
        %v1100 = vrot.slane %v1086, %v1099
        %v1101 = vcombine.high %v1093, %v1093
        %v1102 = vcombine.high %v1100, %v1100
        %1107 = vst.msk [vmem:[%s305 + $0x3] sm:$0x1] %vm530, %v1093
        %1108 = vst.msk [vmem:[%s305 + $0xb] sm:$0x1] %vm530, %v1100
        %1109 = vst.msk [vmem:[%s305 + $0x13] sm:$0x1] %vm530, %v1101
        %1110 = vst.msk [vmem:[%s305 + $0x1b] sm:$0x1] %vm530, %v1102
        %v1111 = vrot.slane %v314, 4
        %v1112 = vrot.slane %v315, 3
        %v1113 = vsel %vm323, %v1112, %v1111
        %v1114 = vrot.slane %v316, 2
        %v1115 = vsel %vm326, %v1114, %v1113
        %v1116 = vrot.slane %v317, 1
        %v1117 = vsel %vm329, %v1116, %v1115
        %1118 = vrot.lane.b32.xlu0 %v1117, 120
        %v1119 = vpop.permute.xlu0 %1118
        %v1120 = vsel %vm337, %v1119, 0
        %1122 = vmatprep.subr.mxu0 0.0
        %1123 = vmatpush1.msra.mxu0 %v1120
        %1124 = vmatprep.subr.mxu0 0.0
        %1125 = vmatpush1.msra.mxu0 0.0
        %1126 = vmatprep.subr.mxu0 0.0
        %1127 = vmatpush1.msra.mxu0 0.0
        %1128 = vmatprep.subr.mxu0 0.0
        %1129 = vmatpush1.msra.mxu0 0.0
        %1130 = vmatprep.subr.mxu0 0.0
        %1131 = vmatpush1.msra.mxu0 0.0
        %1132 = vmatprep.subr.mxu0 0.0
        %1133 = vmatpush1.msra.mxu0 0.0
        %1134 = vmatprep.subr.mxu0 0.0
        %1135 = vmatpush1.msra.mxu0 0.0
        %1136 = vmatprep.subr.mxu0 0.0
        %1137 = vmatpush1.msra.mxu0 0.0
        %1138 = vmatprep.subr.mxu0 0.0
        %1139 = vmatpush1.msra.mxu0 0.0
        %1140 = vmatprep.subr.mxu0 0.0
        %1141 = vmatpush1.msra.mxu0 0.0
        %1142 = vmatprep.subr.mxu0 0.0
        %1143 = vmatpush1.msra.mxu0 0.0
        %1144 = vmatprep.subr.mxu0 0.0
        %1145 = vmatpush1.msra.mxu0 0.0
        %1146 = vmatprep.subr.mxu0 0.0
        %1147 = vmatpush1.msra.mxu0 0.0
        %1148 = vmatprep.subr.mxu0 0.0
        %1149 = vmatpush1.msra.mxu0 0.0
        %1150 = vmatprep.subr.mxu0 0.0
        %1151 = vmatpush1.msra.mxu0 0.0
        %1152 = vmatprep.subr.mxu0 0.0
        %1153 = vmatpush1.msra.mxu0 0.0
        %1154 = vmatprep.subr.mxu0 0.0
        %1155 = vmatpush1.msra.mxu0 0.0
        %1156 = vmatprep.subr.mxu0 0.0
        %1157 = vmatpush1.msra.mxu0 0.0
        %1158 = vmatprep.subr.mxu0 0.0
        %1159 = vmatpush1.msra.mxu0 0.0
        %1160 = vmatprep.subr.mxu0 0.0
        %1161 = vmatpush1.msra.mxu0 0.0
        %1162 = vmatprep.subr.mxu0 0.0
        %1163 = vmatpush1.msra.mxu0 0.0
        %1164 = vmatprep.subr.mxu0 0.0
        %1165 = vmatpush1.msra.mxu0 0.0
        %1166 = vmatprep.subr.mxu0 0.0
        %1167 = vmatpush1.msra.mxu0 0.0
        %1168 = vmatprep.subr.mxu0 0.0
        %1169 = vmatpush1.msra.mxu0 0.0
        %1170 = vmatprep.subr.mxu0 0.0
        %1171 = vmatpush1.msra.mxu0 0.0
        %1172 = vmatprep.subr.mxu0 0.0
        %1173 = vmatpush1.msra.mxu0 0.0
        %1174 = vmatprep.subr.mxu0 0.0
        %1175 = vmatpush1.msra.mxu0 0.0
        %1176 = vmatprep.subr.mxu0 0.0
        %1177 = vmatpush1.msra.mxu0 0.0
        %1178 = vmatprep.subr.mxu0 0.0
        %1179 = vmatpush1.msra.mxu0 0.0
        %1180 = vmatprep.subr.mxu0 0.0
        %1181 = vmatpush1.msra.mxu0 0.0
        %1182 = vmatprep.subr.mxu0 0.0
        %1183 = vmatpush1.msra.mxu0 0.0
        %1184 = vmatprep.subr.mxu0 0.0
        %1185 = vmatpush1.msra.mxu0 0.0
        %1186 = vmatprep.mubr.f32.mxu0 0.0
        %1187 = vmatmul.mubr.f32.gmra.mrb[0].mxu0 %v335
        %v1188 = vpop.f32.mrb[0].mxu0
        %v1189 = vadd.f32 0.0, %v1188
        %v1190 = vpop.f32.mrb[0].mxu0
        %1191 = vdwg.mxu0
        %v1192 = vrot.slane %v310, 4
        %v1193 = vrot.slane %v311, 3
        %v1194 = vsel %vm323, %v1193, %v1192
        %v1195 = vrot.slane %v312, 2
        %v1196 = vsel %vm326, %v1195, %v1194
        %v1197 = vrot.slane %v313, 1
        %v1198 = vsel %vm329, %v1197, %v1196
        %v1199 = vsel %vm337, %v1198, 0
        %1201 = vmatprep.subr.mxu0 0.0
        %1202 = vmatpush1.msra.mxu0 %v1199
        %1203 = vmatprep.subr.mxu0 0.0
        %1204 = vmatpush1.msra.mxu0 0.0
        %1205 = vmatprep.subr.mxu0 0.0
        %1206 = vmatpush1.msra.mxu0 0.0
        %1207 = vmatprep.subr.mxu0 0.0
        %1208 = vmatpush1.msra.mxu0 0.0
        %1209 = vmatprep.subr.mxu0 0.0
        %1210 = vmatpush1.msra.mxu0 0.0
        %1211 = vmatprep.subr.mxu0 0.0
        %1212 = vmatpush1.msra.mxu0 0.0
        %1213 = vmatprep.subr.mxu0 0.0
        %1214 = vmatpush1.msra.mxu0 0.0
        %1215 = vmatprep.subr.mxu0 0.0
        %1216 = vmatpush1.msra.mxu0 0.0
        %1217 = vmatprep.subr.mxu0 0.0
        %1218 = vmatpush1.msra.mxu0 0.0
        %1219 = vmatprep.subr.mxu0 0.0
        %1220 = vmatpush1.msra.mxu0 0.0
        %1221 = vmatprep.subr.mxu0 0.0
        %1222 = vmatpush1.msra.mxu0 0.0
        %1223 = vmatprep.subr.mxu0 0.0
        %1224 = vmatpush1.msra.mxu0 0.0
        %1225 = vmatprep.subr.mxu0 0.0
        %1226 = vmatpush1.msra.mxu0 0.0
        %1227 = vmatprep.subr.mxu0 0.0
        %1228 = vmatpush1.msra.mxu0 0.0
        %1229 = vmatprep.subr.mxu0 0.0
        %1230 = vmatpush1.msra.mxu0 0.0
        %1231 = vmatprep.subr.mxu0 0.0
        %1232 = vmatpush1.msra.mxu0 0.0
        %1233 = vmatprep.subr.mxu0 0.0
        %1234 = vmatpush1.msra.mxu0 0.0
        %1235 = vmatprep.subr.mxu0 0.0
        %1236 = vmatpush1.msra.mxu0 0.0
        %1237 = vmatprep.subr.mxu0 0.0
        %1238 = vmatpush1.msra.mxu0 0.0
        %1239 = vmatprep.subr.mxu0 0.0
        %1240 = vmatpush1.msra.mxu0 0.0
        %1241 = vmatprep.subr.mxu0 0.0
        %1242 = vmatpush1.msra.mxu0 0.0
        %1243 = vmatprep.subr.mxu0 0.0
        %1244 = vmatpush1.msra.mxu0 0.0
        %1245 = vmatprep.subr.mxu0 0.0
        %1246 = vmatpush1.msra.mxu0 0.0
        %1247 = vmatprep.subr.mxu0 0.0
        %1248 = vmatpush1.msra.mxu0 0.0
        %1249 = vmatprep.subr.mxu0 0.0
        %1250 = vmatpush1.msra.mxu0 0.0
        %1251 = vmatprep.subr.mxu0 0.0
        %1252 = vmatpush1.msra.mxu0 0.0
        %1253 = vmatprep.subr.mxu0 0.0
        %1254 = vmatpush1.msra.mxu0 0.0
        %1255 = vmatprep.subr.mxu0 0.0
        %1256 = vmatpush1.msra.mxu0 0.0
        %1257 = vmatprep.subr.mxu0 0.0
        %1258 = vmatpush1.msra.mxu0 0.0
        %1259 = vmatprep.subr.mxu0 0.0
        %1260 = vmatpush1.msra.mxu0 0.0
        %1261 = vmatprep.subr.mxu0 0.0
        %1262 = vmatpush1.msra.mxu0 0.0
        %1263 = vmatprep.subr.mxu0 0.0
        %1264 = vmatpush1.msra.mxu0 0.0
        %1265 = vmatprep.mubr.f32.mxu0 0.0
        %1266 = vmatmul.mubr.f32.gmra.mrb[0].mxu0 %v421
        %v1267 = vpop.f32.mrb[0].mxu0
        %v1268 = vadd.f32 %v1189, %v1267
        %v1269 = vpop.f32.mrb[0].mxu0
        %1270 = vdwg.mxu0
        %v1271 = vadd.f32 %v1268, %v498
        %v1274 = vunpack.c.l.s4 1966171168
        %v1275 = vunpack.c.0.s8 %v1274
        %v1276 = vlaneseq
        %v1277 = vshrl.u32 %v1276, 7
        %v1278 = vsub.s32 %v1275, %v1277
        %v1279 = vrot.slane %v1271, %v1278
        %v1280 = vcombine.high %v1279, %v1279
        %v1282 = vunpack.c.l.s4 1966171168
        %v1283 = vunpack.c.0.s8 %v1282
        %v1284 = vlaneseq
        %v1285 = vshrl.u32 %v1284, 7
        %v1286 = vsub.s32 %v1283, %v1285
        %v1287 = vrot.slane %v1279, %v1286
        %v1289 = vunpack.c.l.s4 1966171168
        %v1290 = vunpack.c.0.s8 %v1289
        %v1291 = vlaneseq
        %v1292 = vshrl.u32 %v1291, 7
        %v1293 = vsub.s32 %v1290, %v1292
        %v1294 = vrot.slane %v1280, %v1293
        %v1295 = vcombine.high %v1287, %v1287
        %v1296 = vcombine.high %v1294, %v1294
        %1301 = vst.msk [vmem:[%s305 + $0x4] sm:$0x1] %vm530, %v1287
        %1302 = vst.msk [vmem:[%s305 + $0xc] sm:$0x1] %vm530, %v1294
        %1303 = vst.msk [vmem:[%s305 + $0x14] sm:$0x1] %vm530, %v1295
        %1304 = vst.msk [vmem:[%s305 + $0x1c] sm:$0x1] %vm530, %v1296
        %v1305 = vrot.slane %v314, 5
        %v1306 = vrot.slane %v315, 4
        %v1307 = vsel %vm323, %v1306, %v1305
        %v1308 = vrot.slane %v316, 3
        %v1309 = vsel %vm326, %v1308, %v1307
        %v1310 = vrot.slane %v317, 2
        %v1311 = vsel %vm329, %v1310, %v1309
        %1312 = vrot.lane.b32.xlu0 %v1311, 120
        %v1313 = vpop.permute.xlu0 %1312
        %v1314 = vsel %vm337, %v1313, 0
        %1316 = vmatprep.subr.mxu0 0.0
        %1317 = vmatpush1.msra.mxu0 %v1314
        %1318 = vmatprep.subr.mxu0 0.0
        %1319 = vmatpush1.msra.mxu0 0.0
        %1320 = vmatprep.subr.mxu0 0.0
        %1321 = vmatpush1.msra.mxu0 0.0
        %1322 = vmatprep.subr.mxu0 0.0
        %1323 = vmatpush1.msra.mxu0 0.0
        %1324 = vmatprep.subr.mxu0 0.0
        %1325 = vmatpush1.msra.mxu0 0.0
        %1326 = vmatprep.subr.mxu0 0.0
        %1327 = vmatpush1.msra.mxu0 0.0
        %1328 = vmatprep.subr.mxu0 0.0
        %1329 = vmatpush1.msra.mxu0 0.0
        %1330 = vmatprep.subr.mxu0 0.0
        %1331 = vmatpush1.msra.mxu0 0.0
        %1332 = vmatprep.subr.mxu0 0.0
        %1333 = vmatpush1.msra.mxu0 0.0
        %1334 = vmatprep.subr.mxu0 0.0
        %1335 = vmatpush1.msra.mxu0 0.0
        %1336 = vmatprep.subr.mxu0 0.0
        %1337 = vmatpush1.msra.mxu0 0.0
        %1338 = vmatprep.subr.mxu0 0.0
        %1339 = vmatpush1.msra.mxu0 0.0
        %1340 = vmatprep.subr.mxu0 0.0
        %1341 = vmatpush1.msra.mxu0 0.0
        %1342 = vmatprep.subr.mxu0 0.0
        %1343 = vmatpush1.msra.mxu0 0.0
        %1344 = vmatprep.subr.mxu0 0.0
        %1345 = vmatpush1.msra.mxu0 0.0
        %1346 = vmatprep.subr.mxu0 0.0
        %1347 = vmatpush1.msra.mxu0 0.0
        %1348 = vmatprep.subr.mxu0 0.0
        %1349 = vmatpush1.msra.mxu0 0.0
        %1350 = vmatprep.subr.mxu0 0.0
        %1351 = vmatpush1.msra.mxu0 0.0
        %1352 = vmatprep.subr.mxu0 0.0
        %1353 = vmatpush1.msra.mxu0 0.0
        %1354 = vmatprep.subr.mxu0 0.0
        %1355 = vmatpush1.msra.mxu0 0.0
        %1356 = vmatprep.subr.mxu0 0.0
        %1357 = vmatpush1.msra.mxu0 0.0
        %1358 = vmatprep.subr.mxu0 0.0
        %1359 = vmatpush1.msra.mxu0 0.0
        %1360 = vmatprep.subr.mxu0 0.0
        %1361 = vmatpush1.msra.mxu0 0.0
        %1362 = vmatprep.subr.mxu0 0.0
        %1363 = vmatpush1.msra.mxu0 0.0
        %1364 = vmatprep.subr.mxu0 0.0
        %1365 = vmatpush1.msra.mxu0 0.0
        %1366 = vmatprep.subr.mxu0 0.0
        %1367 = vmatpush1.msra.mxu0 0.0
        %1368 = vmatprep.subr.mxu0 0.0
        %1369 = vmatpush1.msra.mxu0 0.0
        %1370 = vmatprep.subr.mxu0 0.0
        %1371 = vmatpush1.msra.mxu0 0.0
        %1372 = vmatprep.subr.mxu0 0.0
        %1373 = vmatpush1.msra.mxu0 0.0
        %1374 = vmatprep.subr.mxu0 0.0
        %1375 = vmatpush1.msra.mxu0 0.0
        %1376 = vmatprep.subr.mxu0 0.0
        %1377 = vmatpush1.msra.mxu0 0.0
        %1378 = vmatprep.subr.mxu0 0.0
        %1379 = vmatpush1.msra.mxu0 0.0
        %1380 = vmatprep.mubr.f32.mxu0 0.0
        %1381 = vmatmul.mubr.f32.gmra.mrb[0].mxu0 %v335
        %v1382 = vpop.f32.mrb[0].mxu0
        %v1383 = vadd.f32 0.0, %v1382
        %v1384 = vpop.f32.mrb[0].mxu0
        %1385 = vdwg.mxu0
        %v1386 = vrot.slane %v310, 5
        %v1387 = vrot.slane %v311, 4
        %v1388 = vsel %vm323, %v1387, %v1386
        %v1389 = vrot.slane %v312, 3
        %v1390 = vsel %vm326, %v1389, %v1388
        %v1391 = vrot.slane %v313, 2
        %v1392 = vsel %vm329, %v1391, %v1390
        %v1393 = vsel %vm337, %v1392, 0
        %1395 = vmatprep.subr.mxu0 0.0
        %1396 = vmatpush1.msra.mxu0 %v1393
        %1397 = vmatprep.subr.mxu0 0.0
        %1398 = vmatpush1.msra.mxu0 0.0
        %1399 = vmatprep.subr.mxu0 0.0
        %1400 = vmatpush1.msra.mxu0 0.0
        %1401 = vmatprep.subr.mxu0 0.0
        %1402 = vmatpush1.msra.mxu0 0.0
        %1403 = vmatprep.subr.mxu0 0.0
        %1404 = vmatpush1.msra.mxu0 0.0
        %1405 = vmatprep.subr.mxu0 0.0
        %1406 = vmatpush1.msra.mxu0 0.0
        %1407 = vmatprep.subr.mxu0 0.0
        %1408 = vmatpush1.msra.mxu0 0.0
        %1409 = vmatprep.subr.mxu0 0.0
        %1410 = vmatpush1.msra.mxu0 0.0
        %1411 = vmatprep.subr.mxu0 0.0
        %1412 = vmatpush1.msra.mxu0 0.0
        %1413 = vmatprep.subr.mxu0 0.0
        %1414 = vmatpush1.msra.mxu0 0.0
        %1415 = vmatprep.subr.mxu0 0.0
        %1416 = vmatpush1.msra.mxu0 0.0
        %1417 = vmatprep.subr.mxu0 0.0
        %1418 = vmatpush1.msra.mxu0 0.0
        %1419 = vmatprep.subr.mxu0 0.0
        %1420 = vmatpush1.msra.mxu0 0.0
        %1421 = vmatprep.subr.mxu0 0.0
        %1422 = vmatpush1.msra.mxu0 0.0
        %1423 = vmatprep.subr.mxu0 0.0
        %1424 = vmatpush1.msra.mxu0 0.0
        %1425 = vmatprep.subr.mxu0 0.0
        %1426 = vmatpush1.msra.mxu0 0.0
        %1427 = vmatprep.subr.mxu0 0.0
        %1428 = vmatpush1.msra.mxu0 0.0
        %1429 = vmatprep.subr.mxu0 0.0
        %1430 = vmatpush1.msra.mxu0 0.0
        %1431 = vmatprep.subr.mxu0 0.0
        %1432 = vmatpush1.msra.mxu0 0.0
        %1433 = vmatprep.subr.mxu0 0.0
        %1434 = vmatpush1.msra.mxu0 0.0
        %1435 = vmatprep.subr.mxu0 0.0
        %1436 = vmatpush1.msra.mxu0 0.0
        %1437 = vmatprep.subr.mxu0 0.0
        %1438 = vmatpush1.msra.mxu0 0.0
        %1439 = vmatprep.subr.mxu0 0.0
        %1440 = vmatpush1.msra.mxu0 0.0
        %1441 = vmatprep.subr.mxu0 0.0
        %1442 = vmatpush1.msra.mxu0 0.0
        %1443 = vmatprep.subr.mxu0 0.0
        %1444 = vmatpush1.msra.mxu0 0.0
        %1445 = vmatprep.subr.mxu0 0.0
        %1446 = vmatpush1.msra.mxu0 0.0
        %1447 = vmatprep.subr.mxu0 0.0
        %1448 = vmatpush1.msra.mxu0 0.0
        %1449 = vmatprep.subr.mxu0 0.0
        %1450 = vmatpush1.msra.mxu0 0.0
        %1451 = vmatprep.subr.mxu0 0.0
        %1452 = vmatpush1.msra.mxu0 0.0
        %1453 = vmatprep.subr.mxu0 0.0
        %1454 = vmatpush1.msra.mxu0 0.0
        %1455 = vmatprep.subr.mxu0 0.0
        %1456 = vmatpush1.msra.mxu0 0.0
        %1457 = vmatprep.subr.mxu0 0.0
        %1458 = vmatpush1.msra.mxu0 0.0
        %1459 = vmatprep.mubr.f32.mxu0 0.0
        %1460 = vmatmul.mubr.f32.gmra.mrb[0].mxu0 %v421
        %v1461 = vpop.f32.mrb[0].mxu0
        %v1462 = vadd.f32 %v1383, %v1461
        %v1463 = vpop.f32.mrb[0].mxu0
        %1464 = vdwg.mxu0
        %v1465 = vadd.f32 %v1462, %v498
        %v1468 = vunpack.c.l.s4 1966171168
        %v1469 = vunpack.c.0.s8 %v1468
        %v1470 = vlaneseq
        %v1471 = vshrl.u32 %v1470, 7
        %v1472 = vsub.s32 %v1469, %v1471
        %v1473 = vrot.slane %v1465, %v1472
        %v1474 = vcombine.high %v1473, %v1473
        %v1476 = vunpack.c.l.s4 1966171168
        %v1477 = vunpack.c.0.s8 %v1476
        %v1478 = vlaneseq
        %v1479 = vshrl.u32 %v1478, 7
        %v1480 = vsub.s32 %v1477, %v1479
        %v1481 = vrot.slane %v1473, %v1480
        %v1483 = vunpack.c.l.s4 1966171168
        %v1484 = vunpack.c.0.s8 %v1483
        %v1485 = vlaneseq
        %v1486 = vshrl.u32 %v1485, 7
        %v1487 = vsub.s32 %v1484, %v1486
        %v1488 = vrot.slane %v1474, %v1487
        %v1489 = vcombine.high %v1481, %v1481
        %v1490 = vcombine.high %v1488, %v1488
        %1495 = vst.msk [vmem:[%s305 + $0x5] sm:$0x1] %vm530, %v1481
        %1496 = vst.msk [vmem:[%s305 + $0xd] sm:$0x1] %vm530, %v1488
        %1497 = vst.msk [vmem:[%s305 + $0x15] sm:$0x1] %vm530, %v1489
        %1498 = vst.msk [vmem:[%s305 + $0x1d] sm:$0x1] %vm530, %v1490
        %v1499 = vrot.slane %v314, 6
        %v1500 = vrot.slane %v315, 5
        %v1501 = vsel %vm323, %v1500, %v1499
        %v1502 = vrot.slane %v316, 4
        %v1503 = vsel %vm326, %v1502, %v1501
        %v1504 = vrot.slane %v317, 3
        %v1505 = vsel %vm329, %v1504, %v1503
        %1506 = vrot.lane.b32.xlu0 %v1505, 120
        %v1507 = vpop.permute.xlu0 %1506
        %v1508 = vsel %vm337, %v1507, 0
        %1510 = vmatprep.subr.mxu0 0.0
        %1511 = vmatpush1.msra.mxu0 %v1508
        %1512 = vmatprep.subr.mxu0 0.0
        %1513 = vmatpush1.msra.mxu0 0.0
        %1514 = vmatprep.subr.mxu0 0.0
        %1515 = vmatpush1.msra.mxu0 0.0
        %1516 = vmatprep.subr.mxu0 0.0
        %1517 = vmatpush1.msra.mxu0 0.0
        %1518 = vmatprep.subr.mxu0 0.0
        %1519 = vmatpush1.msra.mxu0 0.0
        %1520 = vmatprep.subr.mxu0 0.0
        %1521 = vmatpush1.msra.mxu0 0.0
        %1522 = vmatprep.subr.mxu0 0.0
        %1523 = vmatpush1.msra.mxu0 0.0
        %1524 = vmatprep.subr.mxu0 0.0
        %1525 = vmatpush1.msra.mxu0 0.0
        %1526 = vmatprep.subr.mxu0 0.0
        %1527 = vmatpush1.msra.mxu0 0.0
        %1528 = vmatprep.subr.mxu0 0.0
        %1529 = vmatpush1.msra.mxu0 0.0
        %1530 = vmatprep.subr.mxu0 0.0
        %1531 = vmatpush1.msra.mxu0 0.0
        %1532 = vmatprep.subr.mxu0 0.0
        %1533 = vmatpush1.msra.mxu0 0.0
        %1534 = vmatprep.subr.mxu0 0.0
        %1535 = vmatpush1.msra.mxu0 0.0
        %1536 = vmatprep.subr.mxu0 0.0
        %1537 = vmatpush1.msra.mxu0 0.0
        %1538 = vmatprep.subr.mxu0 0.0
        %1539 = vmatpush1.msra.mxu0 0.0
        %1540 = vmatprep.subr.mxu0 0.0
        %1541 = vmatpush1.msra.mxu0 0.0
        %1542 = vmatprep.subr.mxu0 0.0
        %1543 = vmatpush1.msra.mxu0 0.0
        %1544 = vmatprep.subr.mxu0 0.0
        %1545 = vmatpush1.msra.mxu0 0.0
        %1546 = vmatprep.subr.mxu0 0.0
        %1547 = vmatpush1.msra.mxu0 0.0
        %1548 = vmatprep.subr.mxu0 0.0
        %1549 = vmatpush1.msra.mxu0 0.0
        %1550 = vmatprep.subr.mxu0 0.0
        %1551 = vmatpush1.msra.mxu0 0.0
        %1552 = vmatprep.subr.mxu0 0.0
        %1553 = vmatpush1.msra.mxu0 0.0
        %1554 = vmatprep.subr.mxu0 0.0
        %1555 = vmatpush1.msra.mxu0 0.0
        %1556 = vmatprep.subr.mxu0 0.0
        %1557 = vmatpush1.msra.mxu0 0.0
        %1558 = vmatprep.subr.mxu0 0.0
        %1559 = vmatpush1.msra.mxu0 0.0
        %1560 = vmatprep.subr.mxu0 0.0
        %1561 = vmatpush1.msra.mxu0 0.0
        %1562 = vmatprep.subr.mxu0 0.0
        %1563 = vmatpush1.msra.mxu0 0.0
        %1564 = vmatprep.subr.mxu0 0.0
        %1565 = vmatpush1.msra.mxu0 0.0
        %1566 = vmatprep.subr.mxu0 0.0
        %1567 = vmatpush1.msra.mxu0 0.0
        %1568 = vmatprep.subr.mxu0 0.0
        %1569 = vmatpush1.msra.mxu0 0.0
        %1570 = vmatprep.subr.mxu0 0.0
        %1571 = vmatpush1.msra.mxu0 0.0
        %1572 = vmatprep.subr.mxu0 0.0
        %1573 = vmatpush1.msra.mxu0 0.0
        %1574 = vmatprep.mubr.f32.mxu0 0.0
        %1575 = vmatmul.mubr.f32.gmra.mrb[0].mxu0 %v335
        %v1576 = vpop.f32.mrb[0].mxu0
        %v1577 = vadd.f32 0.0, %v1576
        %v1578 = vpop.f32.mrb[0].mxu0
        %1579 = vdwg.mxu0
        %v1580 = vrot.slane %v310, 6
        %v1581 = vrot.slane %v311, 5
        %v1582 = vsel %vm323, %v1581, %v1580
        %v1583 = vrot.slane %v312, 4
        %v1584 = vsel %vm326, %v1583, %v1582
        %v1585 = vrot.slane %v313, 3
        %v1586 = vsel %vm329, %v1585, %v1584
        %v1587 = vsel %vm337, %v1586, 0
        %1589 = vmatprep.subr.mxu0 0.0
        %1590 = vmatpush1.msra.mxu0 %v1587
        %1591 = vmatprep.subr.mxu0 0.0
        %1592 = vmatpush1.msra.mxu0 0.0
        %1593 = vmatprep.subr.mxu0 0.0
        %1594 = vmatpush1.msra.mxu0 0.0
        %1595 = vmatprep.subr.mxu0 0.0
        %1596 = vmatpush1.msra.mxu0 0.0
        %1597 = vmatprep.subr.mxu0 0.0
        %1598 = vmatpush1.msra.mxu0 0.0
        %1599 = vmatprep.subr.mxu0 0.0
        %1600 = vmatpush1.msra.mxu0 0.0
        %1601 = vmatprep.subr.mxu0 0.0
        %1602 = vmatpush1.msra.mxu0 0.0
        %1603 = vmatprep.subr.mxu0 0.0
        %1604 = vmatpush1.msra.mxu0 0.0
        %1605 = vmatprep.subr.mxu0 0.0
        %1606 = vmatpush1.msra.mxu0 0.0
        %1607 = vmatprep.subr.mxu0 0.0
        %1608 = vmatpush1.msra.mxu0 0.0
        %1609 = vmatprep.subr.mxu0 0.0
        %1610 = vmatpush1.msra.mxu0 0.0
        %1611 = vmatprep.subr.mxu0 0.0
        %1612 = vmatpush1.msra.mxu0 0.0
        %1613 = vmatprep.subr.mxu0 0.0
        %1614 = vmatpush1.msra.mxu0 0.0
        %1615 = vmatprep.subr.mxu0 0.0
        %1616 = vmatpush1.msra.mxu0 0.0
        %1617 = vmatprep.subr.mxu0 0.0
        %1618 = vmatpush1.msra.mxu0 0.0
        %1619 = vmatprep.subr.mxu0 0.0
        %1620 = vmatpush1.msra.mxu0 0.0
        %1621 = vmatprep.subr.mxu0 0.0
        %1622 = vmatpush1.msra.mxu0 0.0
        %1623 = vmatprep.subr.mxu0 0.0
        %1624 = vmatpush1.msra.mxu0 0.0
        %1625 = vmatprep.subr.mxu0 0.0
        %1626 = vmatpush1.msra.mxu0 0.0
        %1627 = vmatprep.subr.mxu0 0.0
        %1628 = vmatpush1.msra.mxu0 0.0
        %1629 = vmatprep.subr.mxu0 0.0
        %1630 = vmatpush1.msra.mxu0 0.0
        %1631 = vmatprep.subr.mxu0 0.0
        %1632 = vmatpush1.msra.mxu0 0.0
        %1633 = vmatprep.subr.mxu0 0.0
        %1634 = vmatpush1.msra.mxu0 0.0
        %1635 = vmatprep.subr.mxu0 0.0
        %1636 = vmatpush1.msra.mxu0 0.0
        %1637 = vmatprep.subr.mxu0 0.0
        %1638 = vmatpush1.msra.mxu0 0.0
        %1639 = vmatprep.subr.mxu0 0.0
        %1640 = vmatpush1.msra.mxu0 0.0
        %1641 = vmatprep.subr.mxu0 0.0
        %1642 = vmatpush1.msra.mxu0 0.0
        %1643 = vmatprep.subr.mxu0 0.0
        %1644 = vmatpush1.msra.mxu0 0.0
        %1645 = vmatprep.subr.mxu0 0.0
        %1646 = vmatpush1.msra.mxu0 0.0
        %1647 = vmatprep.subr.mxu0 0.0
        %1648 = vmatpush1.msra.mxu0 0.0
        %1649 = vmatprep.subr.mxu0 0.0
        %1650 = vmatpush1.msra.mxu0 0.0
        %1651 = vmatprep.subr.mxu0 0.0
        %1652 = vmatpush1.msra.mxu0 0.0
        %1653 = vmatprep.mubr.f32.mxu0 0.0
        %1654 = vmatmul.mubr.f32.gmra.mrb[0].mxu0 %v421
        %v1655 = vpop.f32.mrb[0].mxu0
        %v1656 = vadd.f32 %v1577, %v1655
        %v1657 = vpop.f32.mrb[0].mxu0
        %1658 = vdwg.mxu0
        %v1659 = vadd.f32 %v1656, %v498
        %v1662 = vunpack.c.l.s4 1966171168
        %v1663 = vunpack.c.0.s8 %v1662
        %v1664 = vlaneseq
        %v1665 = vshrl.u32 %v1664, 7
        %v1666 = vsub.s32 %v1663, %v1665
        %v1667 = vrot.slane %v1659, %v1666
        %v1668 = vcombine.high %v1667, %v1667
        %v1670 = vunpack.c.l.s4 1966171168
        %v1671 = vunpack.c.0.s8 %v1670
        %v1672 = vlaneseq
        %v1673 = vshrl.u32 %v1672, 7
        %v1674 = vsub.s32 %v1671, %v1673
        %v1675 = vrot.slane %v1667, %v1674
        %v1677 = vunpack.c.l.s4 1966171168
        %v1678 = vunpack.c.0.s8 %v1677
        %v1679 = vlaneseq
        %v1680 = vshrl.u32 %v1679, 7
        %v1681 = vsub.s32 %v1678, %v1680
        %v1682 = vrot.slane %v1668, %v1681
        %v1683 = vcombine.high %v1675, %v1675
        %v1684 = vcombine.high %v1682, %v1682
        %1689 = vst.msk [vmem:[%s305 + $0x6] sm:$0x1] %vm530, %v1675
        %1690 = vst.msk [vmem:[%s305 + $0xe] sm:$0x1] %vm530, %v1682
        %1691 = vst.msk [vmem:[%s305 + $0x16] sm:$0x1] %vm530, %v1683
        %1692 = vst.msk [vmem:[%s305 + $0x1e] sm:$0x1] %vm530, %v1684
        %v1693 = vrot.slane %v314, 7
        %v1694 = vrot.slane %v315, 6
        %v1695 = vsel %vm323, %v1694, %v1693
        %v1696 = vrot.slane %v316, 5
        %v1697 = vsel %vm326, %v1696, %v1695
        %v1698 = vrot.slane %v317, 4
        %v1699 = vsel %vm329, %v1698, %v1697
        %1700 = vrot.lane.b32.xlu0 %v1699, 120
        %v1701 = vpop.permute.xlu0 %1700
        %v1702 = vsel %vm337, %v1701, 0
        %1704 = vmatprep.subr.mxu0 0.0
        %1705 = vmatpush1.msra.mxu0 %v1702
        %1706 = vmatprep.subr.mxu0 0.0
        %1707 = vmatpush1.msra.mxu0 0.0
        %1708 = vmatprep.subr.mxu0 0.0
        %1709 = vmatpush1.msra.mxu0 0.0
        %1710 = vmatprep.subr.mxu0 0.0
        %1711 = vmatpush1.msra.mxu0 0.0
        %1712 = vmatprep.subr.mxu0 0.0
        %1713 = vmatpush1.msra.mxu0 0.0
        %1714 = vmatprep.subr.mxu0 0.0
        %1715 = vmatpush1.msra.mxu0 0.0
        %1716 = vmatprep.subr.mxu0 0.0
        %1717 = vmatpush1.msra.mxu0 0.0
        %1718 = vmatprep.subr.mxu0 0.0
        %1719 = vmatpush1.msra.mxu0 0.0
        %1720 = vmatprep.subr.mxu0 0.0
        %1721 = vmatpush1.msra.mxu0 0.0
        %1722 = vmatprep.subr.mxu0 0.0
        %1723 = vmatpush1.msra.mxu0 0.0
        %1724 = vmatprep.subr.mxu0 0.0
        %1725 = vmatpush1.msra.mxu0 0.0
        %1726 = vmatprep.subr.mxu0 0.0
        %1727 = vmatpush1.msra.mxu0 0.0
        %1728 = vmatprep.subr.mxu0 0.0
        %1729 = vmatpush1.msra.mxu0 0.0
        %1730 = vmatprep.subr.mxu0 0.0
        %1731 = vmatpush1.msra.mxu0 0.0
        %1732 = vmatprep.subr.mxu0 0.0
        %1733 = vmatpush1.msra.mxu0 0.0
        %1734 = vmatprep.subr.mxu0 0.0
        %1735 = vmatpush1.msra.mxu0 0.0
        %1736 = vmatprep.subr.mxu0 0.0
        %1737 = vmatpush1.msra.mxu0 0.0
        %1738 = vmatprep.subr.mxu0 0.0
        %1739 = vmatpush1.msra.mxu0 0.0
        %1740 = vmatprep.subr.mxu0 0.0
        %1741 = vmatpush1.msra.mxu0 0.0
        %1742 = vmatprep.subr.mxu0 0.0
        %1743 = vmatpush1.msra.mxu0 0.0
        %1744 = vmatprep.subr.mxu0 0.0
        %1745 = vmatpush1.msra.mxu0 0.0
        %1746 = vmatprep.subr.mxu0 0.0
        %1747 = vmatpush1.msra.mxu0 0.0
        %1748 = vmatprep.subr.mxu0 0.0
        %1749 = vmatpush1.msra.mxu0 0.0
        %1750 = vmatprep.subr.mxu0 0.0
        %1751 = vmatpush1.msra.mxu0 0.0
        %1752 = vmatprep.subr.mxu0 0.0
        %1753 = vmatpush1.msra.mxu0 0.0
        %1754 = vmatprep.subr.mxu0 0.0
        %1755 = vmatpush1.msra.mxu0 0.0
        %1756 = vmatprep.subr.mxu0 0.0
        %1757 = vmatpush1.msra.mxu0 0.0
        %1758 = vmatprep.subr.mxu0 0.0
        %1759 = vmatpush1.msra.mxu0 0.0
        %1760 = vmatprep.subr.mxu0 0.0
        %1761 = vmatpush1.msra.mxu0 0.0
        %1762 = vmatprep.subr.mxu0 0.0
        %1763 = vmatpush1.msra.mxu0 0.0
        %1764 = vmatprep.subr.mxu0 0.0
        %1765 = vmatpush1.msra.mxu0 0.0
        %1766 = vmatprep.subr.mxu0 0.0
        %1767 = vmatpush1.msra.mxu0 0.0
        %1768 = vmatprep.mubr.f32.mxu0 0.0
        %1769 = vmatmul.mubr.f32.gmra.mrb[0].mxu0 %v335
        %v1770 = vpop.f32.mrb[0].mxu0
        %v1771 = vadd.f32 0.0, %v1770
        %v1772 = vpop.f32.mrb[0].mxu0
        %1773 = vdwg.mxu0
        %v1774 = vrot.slane %v310, 7
        %v1775 = vrot.slane %v311, 6
        %v1776 = vsel %vm323, %v1775, %v1774
        %v1777 = vrot.slane %v312, 5
        %v1778 = vsel %vm326, %v1777, %v1776
        %v1779 = vrot.slane %v313, 4
        %v1780 = vsel %vm329, %v1779, %v1778
        %v1781 = vsel %vm337, %v1780, 0
        %1783 = vmatprep.subr.mxu0 0.0
        %1784 = vmatpush1.msra.mxu0 %v1781
        %1785 = vmatprep.subr.mxu0 0.0
        %1786 = vmatpush1.msra.mxu0 0.0
        %1787 = vmatprep.subr.mxu0 0.0
        %1788 = vmatpush1.msra.mxu0 0.0
        %1789 = vmatprep.subr.mxu0 0.0
        %1790 = vmatpush1.msra.mxu0 0.0
        %1791 = vmatprep.subr.mxu0 0.0
        %1792 = vmatpush1.msra.mxu0 0.0
        %1793 = vmatprep.subr.mxu0 0.0
        %1794 = vmatpush1.msra.mxu0 0.0
        %1795 = vmatprep.subr.mxu0 0.0
        %1796 = vmatpush1.msra.mxu0 0.0
        %1797 = vmatprep.subr.mxu0 0.0
        %1798 = vmatpush1.msra.mxu0 0.0
        %1799 = vmatprep.subr.mxu0 0.0
        %1800 = vmatpush1.msra.mxu0 0.0
        %1801 = vmatprep.subr.mxu0 0.0
        %1802 = vmatpush1.msra.mxu0 0.0
        %1803 = vmatprep.subr.mxu0 0.0
        %1804 = vmatpush1.msra.mxu0 0.0
        %1805 = vmatprep.subr.mxu0 0.0
        %1806 = vmatpush1.msra.mxu0 0.0
        %1807 = vmatprep.subr.mxu0 0.0
        %1808 = vmatpush1.msra.mxu0 0.0
        %1809 = vmatprep.subr.mxu0 0.0
        %1810 = vmatpush1.msra.mxu0 0.0
        %1811 = vmatprep.subr.mxu0 0.0
        %1812 = vmatpush1.msra.mxu0 0.0
        %1813 = vmatprep.subr.mxu0 0.0
        %1814 = vmatpush1.msra.mxu0 0.0
        %1815 = vmatprep.subr.mxu0 0.0
        %1816 = vmatpush1.msra.mxu0 0.0
        %1817 = vmatprep.subr.mxu0 0.0
        %1818 = vmatpush1.msra.mxu0 0.0
        %1819 = vmatprep.subr.mxu0 0.0
        %1820 = vmatpush1.msra.mxu0 0.0
        %1821 = vmatprep.subr.mxu0 0.0
        %1822 = vmatpush1.msra.mxu0 0.0
        %1823 = vmatprep.subr.mxu0 0.0
        %1824 = vmatpush1.msra.mxu0 0.0
        %1825 = vmatprep.subr.mxu0 0.0
        %1826 = vmatpush1.msra.mxu0 0.0
        %1827 = vmatprep.subr.mxu0 0.0
        %1828 = vmatpush1.msra.mxu0 0.0
        %1829 = vmatprep.subr.mxu0 0.0
        %1830 = vmatpush1.msra.mxu0 0.0
        %1831 = vmatprep.subr.mxu0 0.0
        %1832 = vmatpush1.msra.mxu0 0.0
        %1833 = vmatprep.subr.mxu0 0.0
        %1834 = vmatpush1.msra.mxu0 0.0
        %1835 = vmatprep.subr.mxu0 0.0
        %1836 = vmatpush1.msra.mxu0 0.0
        %1837 = vmatprep.subr.mxu0 0.0
        %1838 = vmatpush1.msra.mxu0 0.0
        %1839 = vmatprep.subr.mxu0 0.0
        %1840 = vmatpush1.msra.mxu0 0.0
        %1841 = vmatprep.subr.mxu0 0.0
        %1842 = vmatpush1.msra.mxu0 0.0
        %1843 = vmatprep.subr.mxu0 0.0
        %1844 = vmatpush1.msra.mxu0 0.0
        %1845 = vmatprep.subr.mxu0 0.0
        %1846 = vmatpush1.msra.mxu0 0.0
        %1847 = vmatprep.mubr.f32.mxu0 0.0
        %1848 = vmatmul.mubr.f32.gmra.mrb[0].mxu0 %v421
        %v1849 = vpop.f32.mrb[0].mxu0
        %v1850 = vadd.f32 %v1771, %v1849
        %v1851 = vpop.f32.mrb[0].mxu0
        %1852 = vdwg.mxu0
        %v1853 = vadd.f32 %v1850, %v498
        %v1856 = vunpack.c.l.s4 1966171168
        %v1857 = vunpack.c.0.s8 %v1856
        %v1858 = vlaneseq
        %v1859 = vshrl.u32 %v1858, 7
        %v1860 = vsub.s32 %v1857, %v1859
        %v1861 = vrot.slane %v1853, %v1860
        %v1862 = vcombine.high %v1861, %v1861
        %v1864 = vunpack.c.l.s4 1966171168
        %v1865 = vunpack.c.0.s8 %v1864
        %v1866 = vlaneseq
        %v1867 = vshrl.u32 %v1866, 7
        %v1868 = vsub.s32 %v1865, %v1867
        %v1869 = vrot.slane %v1861, %v1868
        %v1871 = vunpack.c.l.s4 1966171168
        %v1872 = vunpack.c.0.s8 %v1871
        %v1873 = vlaneseq
        %v1874 = vshrl.u32 %v1873, 7
        %v1875 = vsub.s32 %v1872, %v1874
        %v1876 = vrot.slane %v1862, %v1875
        %v1877 = vcombine.high %v1869, %v1869
        %v1878 = vcombine.high %v1876, %v1876
        %1883 = vst.msk [vmem:[%s305 + $0x7] sm:$0x1] %vm530, %v1869
        %1884 = vst.msk [vmem:[%s305 + $0xf] sm:$0x1] %vm530, %v1876
        %1885 = vst.msk [vmem:[%s305 + $0x17] sm:$0x1] %vm530, %v1877
        %1886 = vst.msk [vmem:[%s305 + $0x1f] sm:$0x1] %vm530, %v1878
        %s1887 = sand.u32 %s168, 1
        %s1888 = scalar_lea.sflag [#allocation4], %s1887
        %s1889 = sand.u32 %s168, 1
        %s1890 = smul.addr %s1889, 32
        %s1891 = scalar_lea.vmem [#allocation7], %s1890
        // Predicated region
        $region49: #{tpu_custom_call.1} parent=39 // pred_check
          %p1892 = pneg %p178
        $region50: #{tpu_custom_call.1} parent=39 // pred_check_branch
          %1894 = sbr.rel (%p1892) target = $region52
        $region51: #{tpu_custom_call.1} parent=39 // pred_region
          %s1896 = ssub.s32 512, 512
          %1897 = vsyncadd %s1888, %s1896
          %s1898 = smul.addr %s29, 8
          %s1899 = sadd.s32 %s30, %s1898
          %s1900 = smul.addr %s1899, 128
          %s1901 = scalar_lea.hbm %s5, %s1900
          %s1902 = sshll.u32 %s1891, 4
          %s1903 = int_to_ptr.vmem [resolvable:$true] %s1902
          %1908 = dma.vmem_to_hbm [thread:$0]  %s1903, 512, %s1901, %s1888, 128, 256, 8
        $region52: #{tpu_custom_call.1} parent=39 // pred_fallthru
          _
      $region40: #{tpu_custom_call.1} parent=5 // pred_fallthru
        _
      %p1909 = scmp.le.s32.totalorder 2, %s20
      // Predicated region
      $region53: #{tpu_custom_call.1} parent=5 // pred_check
        %p1910 = pneg %p1909
      $region54: #{tpu_custom_call.1} parent=5 // pred_check_branch
        %1912 = sbr.rel (%p1910) target = $region56
      $region55: #{tpu_custom_call.1} parent=5 // pred_region
        %s1913 = ssub.s32 %s20, 2
        // Predicated region
        $region57: #{tpu_custom_call.1} parent=55 // pred_check
          %p1914 = pneg %p184
        $region58: #{tpu_custom_call.1} parent=55 // pred_check_branch
          %1916 = sbr.rel (%p1914) target = $region60
        $region59: #{tpu_custom_call.1} parent=55 // pred_region
          %s1917 = sand.u32 %s169, 1
          %s1918 = scalar_lea.sflag [#allocation4], %s1917
          %s1919 = sand.u32 %s169, 1
          %s1920 = smul.addr %s1919, 32
          %s1921 = scalar_lea.vmem [#allocation7], %s1920
          %1922 = dma.done %s1918, 512
        $region60: #{tpu_custom_call.1} parent=55 // pred_fallthru
          _
      $region56: #{tpu_custom_call.1} parent=5 // pred_fallthru
        _
    $region6: #{tpu_custom_call.1} parent=1 // loop_footer
      %s24 = sadd.s32 1, %s20
    $region7: #{tpu_custom_call.1} parent=1 // loop_footer_branch
      %19 = sbr.rel target = $region3
    $region8: #{tpu_custom_call.1} parent=1 // loop_exit
      _
    %1923 = vsyncpa [#allocation3], 1
    %s1924 = scalar_lea.sflag [#allocation3], 1
    %1925 = vsyncpa %s1924, 1
    %1926 = vsyncpa [#allocation6], 1
    %s1927 = scalar_lea.sflag [#allocation6], 1
    %1928 = vsyncpa %s1927, 1
    %1929 = vsyncpa [#allocation4], 1
    %s1930 = scalar_lea.sflag [#allocation4], 1
    %1931 = vsyncpa %s1930, 1

</llo_original>
